<compile_context>
chip_gen: v6e
topology: v6e:2x2x1
jax: 0.10.0
libtpu: 0.0.40
codegen_flags: <defaults>
</compile_context>

<pallas_src>
import functools
import math

import jax
import jax.numpy as jnp
import numpy as np
from jax import lax
from jax.experimental import pallas as pl
from jax.experimental.pallas import tpu as pltpu


def _vae_kernel(x_ref, w_e1_ref, b_e1_ref, w_mulv_ref, b_mulv_ref, eps_ref,
                w_d1_ref, b_d1_ref, w_d2_ref, b_d2_ref, var_x_ref,
                xmean_ref, stats_ref, *, total_rows, act_dtype):
    f32 = jnp.float32
    bf16 = jnp.bfloat16

    x = x_ref[...]                                   # (tb, D) f32
    tb, D = x.shape
    P = eps_ref.shape[0]
    Lp = eps_ref.shape[2]

    # ---- encoder (bf16 MXU operands, f32 accumulation) ----
    h_pre = jnp.dot(x.astype(bf16), w_e1_ref[...],
                    preferred_element_type=f32) + b_e1_ref[...]          # (tb, Hp)
    h = jnp.tanh(h_pre.astype(act_dtype))                                # bf16 on v6e/v7x
    # fused mu|logvar head: single (Hp, 2*Lp) matmul, lane-aligned slices
    head = jnp.dot(h.astype(bf16), w_mulv_ref[...],
                   preferred_element_type=f32) + b_mulv_ref[...]         # (tb, 2*Lp)
    mu = head[:, :Lp]                                                    # (tb, Lp)
    logvar = head[:, Lp:]                                                # (tb, Lp)

    # ---- reparameterization: z = mu + std * eps (f32 math, eps upcast) ----
    std = jnp.exp(0.5 * logvar)                                          # (tb, Lp)
    eps = eps_ref[...].astype(f32)                                       # (P, tb, Lp)
    z = mu[None, :, :] + std[None, :, :] * eps                           # (P, tb, Lp)

    # ---- decoder: collapse particle axis -> plain 2-D MXU matmuls ----
    z2 = z.reshape(P * tb, Lp).astype(bf16)                              # (P*tb, Lp)
    hd_pre = jnp.dot(z2, w_d1_ref[...],
                     preferred_element_type=f32) + b_d1_ref[...]         # (P*tb, Hp)
    hd = jnp.tanh(hd_pre.astype(act_dtype))
    x_mean2 = jnp.dot(hd.astype(bf16), w_d2_ref[...],
                      preferred_element_type=f32) + b_d2_ref[...]        # (P*tb, D)
    x_mean = x_mean2.reshape(P, tb, D)                                   # (P, tb, D) f32
    xmean_ref[...] = x_mean.astype(xmean_ref.dtype)                      # bf16 writeback

    # ---- ELBO pieces (f32) ----
    var_x = var_x_ref[0]
    inv_var = 1.0 / var_x
    log_var = jnp.log(var_x)

    diff = x_mean - x[None, :, :]
    sq_sum = jnp.sum(diff * diff, axis=-1, keepdims=True)                # (P, tb, 1)
    # gaussian_nll_loss (full=False) summed over D, constants hoisted
    ll = -(0.5 * inv_var) * sq_sum - (0.5 * D) * log_var                 # (P, tb, 1)

    # KL( N(mu, std^2) || N(0, 1) ); std*std instead of exp(logvar)
    kl = 0.5 * jnp.sum(mu * mu + std * std - logvar - 1.0,
                       axis=-1, keepdims=True)                           # (tb, 1)

    elbo = ll - kl[None, :, :]                                           # (P, tb, 1)
    m = jnp.max(elbo, axis=0)                                            # (tb, 1)
    iwae = m + jnp.log(jnp.sum(jnp.exp(elbo - m[None]), axis=0)) \
        - math.log(P)                                                    # (tb, 1)

    # ---- mask padded batch rows so they contribute 0 to the loss sums ----
    base = pl.program_id(0) * tb
    row_ids = base + lax.broadcasted_iota(jnp.int32, (tb, 1), 0)
    valid = (row_ids < total_rows).astype(f32)                           # (tb, 1)

    iwae_sum = jnp.sum(iwae * valid)
    ll_sum = jnp.sum(ll * valid[None])
    kl_sum = jnp.sum(kl * valid)

    # ---- per-tile partial sums, packed into one lane-dense (8,128) tile ----
    row = lax.broadcasted_iota(jnp.int32, (8, 128), 0)
    packed = (jnp.where(row == 0, iwae_sum, 0.0)
              + jnp.where(row == 1, ll_sum, 0.0)
              + jnp.where(row == 2, kl_sum, 0.0)).astype(f32)
    stats_ref[...] = packed[None, :, :]


def _round_up(n, m):
    return ((n + m - 1) // m) * m


def _cdiv(a, b):
    return -(-a // b)


def _vmem_limit_bytes():
    cap = 64 * 1024 * 1024
    try:
        cap = int(pltpu.get_tpu_info().vmem_capacity_bytes)
    except Exception:
        pass
    # ~75% of physical VMEM, capped at 100 MiB: v5e/v6e (128 MiB) -> 96 MiB,
    # v7x (64 MiB per TC) -> 48 MiB.
    return min((cap * 3) // 4, 100 * 1024 * 1024)


def _use_bf16_activations():
    """bf16 tanh only on chips whose VPU/EUP have a bf16 path (v6e / v7x)."""
    try:
        kind = jax.devices()[0].device_kind.lower()
    except Exception:
        return False
    return not any(tag in kind for tag in ("v2", "v3", "v4", "v5"))


def _pick_batch_tile(B, D, Hp, Lp, P, vmem_limit, max_tile=512):
    """Largest 8-aligned batch tile whose working set fits the VMEM budget."""
    # tb-independent bytes: weight blocks (double-buffered bf16) + f32 biases
    weight_bytes = 2 * 2 * (D * Hp + Hp * 2 * Lp + Lp * Hp + Hp * D)
    bias_bytes = 2 * 4 * (2 * Hp + 2 * Lp + D)
    budget = int(vmem_limit * 0.6) - weight_bytes - bias_bytes
    # per-batch-row bytes: double-buffered x (f32) + eps (bf16) + x_mean out (bf16)
    io_per_row = 2 * (D * 4 + P * Lp * 2 + P * D * 2)
    # live f32 intermediates: h, head, mu/std/z, hd, x_mean + diff
    live_per_row = 4 * (Hp + 2 * Lp + 3 * P * Lp + P * Hp + 2 * P * D)
    per_row = max(1, io_per_row + live_per_row)
    tb = (max(budget, 0) // per_row) // 8 * 8
    tb = max(8, min(max_tile, tb))
    # don't over-pad tiny batches, but still leave >= 2 tiles for the 2-TC split
    tb = min(tb, max(8, _round_up(_cdiv(B, 2), 8)))
    return tb


def make_params(key, input_len, hidden, latent):
    """Deterministic synthetic parameters (no checkpoint load)."""
    ks = jax.random.split(key, 8)

    def lin(k, fan_in, fan_out):
        w = jax.random.normal(k, (fan_in, fan_out), jnp.float32) / np.sqrt(fan_in)
        b = jnp.zeros((1, fan_out), jnp.float32)
        return w, b

    w_e1, b_e1 = lin(ks[0], input_len, hidden)
    w_mu, b_mu = lin(ks[1], hidden, latent)
    w_lv, b_lv = lin(ks[2], hidden, latent)
    w_d1, b_d1 = lin(ks[3], latent, hidden)
    w_d2, b_d2 = lin(ks[4], hidden, input_len)
    return dict(w_e1=w_e1, b_e1=b_e1, w_mu=w_mu, b_mu=b_mu, w_lv=w_lv,
                b_lv=b_lv, w_d1=w_d1, b_d1=b_d1, w_d2=w_d2, b_d2=b_d2)


def base_vae_forward(x, eps, params, var_x, *, max_batch_tile=512):
    """Replicates BaseVAE.forward (continuous path). Returns (x_mean, loss).

    x_mean is returned in bfloat16 (HBM-writeback saving); losses are f32.
    """
    B = x.shape[0]
    P, _, L = eps.shape
    D = int(np.prod(x.shape[1:]))
    H = params['w_e1'].shape[1]
    x_flat = x.reshape(B, D).astype(jnp.float32)        # torch.flatten(x, 1)

    # ----- lane-dense padding of the tiny hidden/latent dims (exact) -----
    Hp = _round_up(H, 128)
    Lp = _round_up(L, 128)
    bf16 = jnp.bfloat16

    def pad2(a, rows, cols):
        return jnp.pad(a, ((0, rows - a.shape[0]), (0, cols - a.shape[1])))

    w_e1 = pad2(params['w_e1'], D, Hp).astype(bf16)
    b_e1 = pad2(params['b_e1'], 1, Hp).astype(jnp.float32)
    # fused mu|logvar head weights: (Hp, 2*Lp)
    w_mulv = pad2(jnp.concatenate([pad2(params['w_mu'], H, Lp),
                                   pad2(params['w_lv'], H, Lp)], axis=1),
                  Hp, 2 * Lp).astype(bf16)
    b_mulv = jnp.concatenate([pad2(params['b_mu'], 1, Lp),
                              pad2(params['b_lv'], 1, Lp)],
                             axis=1).astype(jnp.float32)
    w_d1 = pad2(params['w_d1'], Lp, Hp).astype(bf16)
    b_d1 = pad2(params['b_d1'], 1, Hp).astype(jnp.float32)
    w_d2 = pad2(params['w_d2'], Hp, D).astype(bf16)
    b_d2 = params['b_d2'].astype(jnp.float32)
    var_x = var_x.astype(jnp.float32)

    # ----- batch-tiled grid: VMEM-budgeted tile, padded batch, >= 2 tiles -----
    vmem_limit = _vmem_limit_bytes()
    tb = _pick_batch_tile(B, D, Hp, Lp, P, vmem_limit, max_batch_tile)
    num_tiles = max(2, _cdiv(B, tb))                     # both v7x TCs get work
    B_pad = num_tiles * tb

    x_flat = jnp.pad(x_flat, ((0, B_pad - B), (0, 0)))
    eps_p = jnp.pad(eps, ((0, 0), (0, B_pad - B), (0, Lp - L))).astype(bf16)

    act_dtype = jnp.bfloat16 if _use_bf16_activations() else jnp.float32
    kernel = functools.partial(_vae_kernel, total_rows=B, act_dtype=act_dtype)

    const = lambda i: (0, 0)
    grid_spec = pltpu.PrefetchScalarGridSpec(
        num_scalar_prefetch=0,
        grid=(num_tiles,),
        in_specs=[
            pl.BlockSpec((tb, D), lambda i: (i, 0)),            # x
            pl.BlockSpec((D, Hp), const),                       # w_e1
            pl.BlockSpec((1, Hp), const),                       # b_e1
            pl.BlockSpec((Hp, 2 * Lp), const),                  # w_mulv
            pl.BlockSpec((1, 2 * Lp), const),                   # b_mulv
            pl.BlockSpec((P, tb, Lp), lambda i: (0, i, 0)),     # eps (bf16)
            pl.BlockSpec((Lp, Hp), const),                      # w_d1
            pl.BlockSpec((1, Hp), const),                       # b_d1
            pl.BlockSpec((Hp, D), const),                       # w_d2
            pl.BlockSpec((1, D), const),                        # b_d2
            pl.BlockSpec(memory_space=pltpu.MemorySpace.SMEM),  # var_x scalar
        ],
        out_specs=(
            pl.BlockSpec((P, tb, D), lambda i: (0, i, 0)),      # x_mean (bf16)
            pl.BlockSpec((1, 8, 128), lambda i: (i, 0, 0)),     # per-tile loss sums
        ),
    )

    out_shape = (
        jax.ShapeDtypeStruct((P, B_pad, D), jnp.bfloat16),
        jax.ShapeDtypeStruct((num_tiles, 8, 128), jnp.float32),
    )

    x_mean_flat, stats = pl.pallas_call(
        kernel,
        out_shape=out_shape,
        grid_spec=grid_spec,
        compiler_params=pltpu.CompilerParams(
            dimension_semantics=("parallel",),      # split tiles across TCs
            vmem_limit_bytes=vmem_limit,
        ),
    )(x_flat, w_e1, b_e1, w_mulv, b_mulv, eps_p, w_d1, b_d1, w_d2, b_d2, var_x)

    # cross-tile reduction of the per-tile partial sums (means of the spec);
    # padded rows were masked to zero inside the kernel.
    elbo = jnp.sum(stats[:, 0, 0]) / B                  # iwae_ave(elbo).mean()
    ll = jnp.sum(stats[:, 1, 0]) / (P * B)              # ll.mean()
    kl = jnp.sum(stats[:, 2, 0]) / B                    # kl.mean()

    x_mean = x_mean_flat[:, :B, :].reshape((P,) + x.shape)   # (P, B, T, C) bf16
    loss = {'NELBO': -elbo, 'Recon': -ll, 'KL': kl}
    return x_mean, loss


if __name__ == "__main__":
    # Multivariate time-series input, input_shape=(T, C), flatten=1 -> D = T*C,
    # continuous input type.
    B, T, C = 2, 8, 16       # batch, time, channels
    D = T * C                # input_len = 128
    H, L = 32, 16            # hidden width, latent dim
    P = 4                    # num_particles

    key = jax.random.PRNGKey(0)
    k_x, k_eps, k_par = jax.random.split(key, 3)

    x = jax.random.normal(k_x, (B, T, C), jnp.float32)
    eps = jax.random.normal(k_eps, (P, B, L), jnp.float32)
    params = make_params(k_par, D, H, L)
    var_x = jnp.array([0.001], jnp.float32)             # nn.Parameter([0.001])

    x_mean, loss = base_vae_forward(x, eps, params, var_x)
    jax.block_until_ready((x_mean, loss))

    assert x_mean.shape == (P, B, T, C)
    assert all(bool(jnp.isfinite(v)) for v in loss.values())
    print("KERNEL_OK")
</pallas_src>

<mosaic_0001>
module attributes {stable_mosaic.version = 11 : i64} {
  func.func @_vae_kernel(%arg0: i32, %arg1: memref<8x128xf32, #tpu.memory_space<vmem>>, %arg2: memref<128x128xbf16, #tpu.memory_space<vmem>>, %arg3: memref<1x128xf32, #tpu.memory_space<vmem>>, %arg4: memref<128x256xbf16, #tpu.memory_space<vmem>>, %arg5: memref<1x256xf32, #tpu.memory_space<vmem>>, %arg6: memref<4x8x128xbf16, #tpu.memory_space<vmem>>, %arg7: memref<128x128xbf16, #tpu.memory_space<vmem>>, %arg8: memref<1x128xf32, #tpu.memory_space<vmem>>, %arg9: memref<128x128xbf16, #tpu.memory_space<vmem>>, %arg10: memref<1x128xf32, #tpu.memory_space<vmem>>, %arg11: memref<1xf32, #tpu.memory_space<smem>>, %arg12: memref<4x8x128xbf16, #tpu.memory_space<vmem>>, %arg13: memref<1x8x128xf32, #tpu.memory_space<vmem>>) attributes {dimension_semantics = [#tpu.dimension_semantics<parallel>], iteration_bounds = array<i64: 2>, scalar_prefetch = 0 : i64, scratch_operands = 0 : i64, tpu.core_type = #tpu.core_type<tc>, window_params = [{transform_indices = @transform_0, window_bounds = array<i64: 8, 128>}, {pipeline_mode = #tpu.pipeline_mode<synchronous>, transform_indices = @transform_1, window_bounds = array<i64: 128, 128>}, {pipeline_mode = #tpu.pipeline_mode<synchronous>, transform_indices = @transform_2, window_bounds = array<i64: 1, 128>}, {pipeline_mode = #tpu.pipeline_mode<synchronous>, transform_indices = @transform_3, window_bounds = array<i64: 128, 256>}, {pipeline_mode = #tpu.pipeline_mode<synchronous>, transform_indices = @transform_4, window_bounds = array<i64: 1, 256>}, {transform_indices = @transform_5, window_bounds = array<i64: 4, 8, 128>}, {pipeline_mode = #tpu.pipeline_mode<synchronous>, transform_indices = @transform_6, window_bounds = array<i64: 128, 128>}, {pipeline_mode = #tpu.pipeline_mode<synchronous>, transform_indices = @transform_7, window_bounds = array<i64: 1, 128>}, {pipeline_mode = #tpu.pipeline_mode<synchronous>, transform_indices = @transform_8, window_bounds = array<i64: 128, 128>}, {pipeline_mode = #tpu.pipeline_mode<synchronous>, transform_indices = @transform_9, window_bounds = array<i64: 1, 128>}, {transform_indices = @transform_10, window_bounds = array<i64: 1>}, {transform_indices = @transform_11, window_bounds = array<i64: 4, 8, 128>}, {transform_indices = @transform_12, window_bounds = array<i64: 1, 8, 128>}]} {
    %c0 = arith.constant 0 : index
    %c0_0 = arith.constant 0 : index
    %0 = vector.load %arg1[%c0, %c0_0] : memref<8x128xf32, #tpu.memory_space<vmem>>, vector<8x128xf32>
    %1 = arith.truncf %0 : vector<8x128xf32> to vector<8x128xbf16>
    %c0_1 = arith.constant 0 : index
    %c0_2 = arith.constant 0 : index
    %2 = vector.load %arg2[%c0_1, %c0_2] : memref<128x128xbf16, #tpu.memory_space<vmem>>, vector<128x128xbf16>
    %cst = arith.constant dense<0.000000e+00> : vector<8x128xf32>
    %3 = tpu.matmul %1, %2, %cst {dimension_numbers = #tpu.dot_dimension_numbers<[1], [0], [0], [1], [0, 0, 1, 1], [], []>} : vector<8x128xbf16>, vector<128x128xbf16>, vector<8x128xf32> -> vector<8x128xf32>
    %c0_3 = arith.constant 0 : index
    %c0_4 = arith.constant 0 : index
    %4 = vector.load %arg3[%c0_3, %c0_4] : memref<1x128xf32, #tpu.memory_space<vmem>>, vector<1x128xf32>
    %5 = vector.broadcast %4 : vector<1x128xf32> to vector<8x128xf32>
    %6 = arith.addf %3, %5 : vector<8x128xf32>
    %7 = arith.truncf %6 : vector<8x128xf32> to vector<8x128xbf16>
    %8 = math.tanh %7 : vector<8x128xbf16>
    %c0_5 = arith.constant 0 : index
    %c0_6 = arith.constant 0 : index
    %9 = vector.load %arg4[%c0_5, %c0_6] : memref<128x256xbf16, #tpu.memory_space<vmem>>, vector<128x256xbf16>
    %cst_7 = arith.constant dense<0.000000e+00> : vector<8x256xf32>
    %10 = tpu.matmul %8, %9, %cst_7 {dimension_numbers = #tpu.dot_dimension_numbers<[1], [0], [0], [1], [0, 0, 1, 1], [], []>} : vector<8x128xbf16>, vector<128x256xbf16>, vector<8x256xf32> -> vector<8x256xf32>
    %c0_8 = arith.constant 0 : index
    %c0_9 = arith.constant 0 : index
    %11 = vector.load %arg5[%c0_8, %c0_9] : memref<1x256xf32, #tpu.memory_space<vmem>>, vector<1x256xf32>
    %12 = vector.broadcast %11 : vector<1x256xf32> to vector<8x256xf32>
    %13 = arith.addf %10, %12 : vector<8x256xf32>
    %14 = vector.extract_strided_slice %13 {offsets = [0, 0], sizes = [8, 128], strides = [1, 1]} : vector<8x256xf32> to vector<8x128xf32>
    %15 = vector.extract_strided_slice %13 {offsets = [0, 128], sizes = [8, 128], strides = [1, 1]} : vector<8x256xf32> to vector<8x128xf32>
    %cst_10 = arith.constant 5.000000e-01 : f32
    %16 = vector.broadcast %cst_10 : f32 to vector<8x128xf32>
    %17 = arith.mulf %16, %15 : vector<8x128xf32>
    %18 = math.exp %17 : vector<8x128xf32>
    %c0_11 = arith.constant 0 : index
    %c0_12 = arith.constant 0 : index
    %c0_13 = arith.constant 0 : index
    %19 = vector.load %arg6[%c0_11, %c0_12, %c0_13] : memref<4x8x128xbf16, #tpu.memory_space<vmem>>, vector<4x8x128xbf16>
    %20 = arith.extf %19 : vector<4x8x128xbf16> to vector<4x8x128xf32>
    %21 = vector.shape_cast %14 : vector<8x128xf32> to vector<1x8x128xf32>
    %22 = vector.shape_cast %18 : vector<8x128xf32> to vector<1x8x128xf32>
    %23 = vector.broadcast %22 : vector<1x8x128xf32> to vector<4x8x128xf32>
    %24 = arith.mulf %23, %20 : vector<4x8x128xf32>
    %25 = vector.broadcast %21 : vector<1x8x128xf32> to vector<4x8x128xf32>
    %26 = arith.addf %25, %24 : vector<4x8x128xf32>
    %27 = vector.shape_cast %26 : vector<4x8x128xf32> to vector<32x128xf32>
    %28 = arith.truncf %27 : vector<32x128xf32> to vector<32x128xbf16>
    %c0_14 = arith.constant 0 : index
    %c0_15 = arith.constant 0 : index
    %29 = vector.load %arg7[%c0_14, %c0_15] : memref<128x128xbf16, #tpu.memory_space<vmem>>, vector<128x128xbf16>
    %cst_16 = arith.constant dense<0.000000e+00> : vector<32x128xf32>
    %30 = tpu.matmul %28, %29, %cst_16 {dimension_numbers = #tpu.dot_dimension_numbers<[1], [0], [0], [1], [0, 0, 1, 1], [], []>} : vector<32x128xbf16>, vector<128x128xbf16>, vector<32x128xf32> -> vector<32x128xf32>
    %c0_17 = arith.constant 0 : index
    %c0_18 = arith.constant 0 : index
    %31 = vector.load %arg8[%c0_17, %c0_18] : memref<1x128xf32, #tpu.memory_space<vmem>>, vector<1x128xf32>
    %32 = vector.broadcast %31 : vector<1x128xf32> to vector<32x128xf32>
    %33 = arith.addf %30, %32 : vector<32x128xf32>
    %34 = arith.truncf %33 : vector<32x128xf32> to vector<32x128xbf16>
    %35 = math.tanh %34 : vector<32x128xbf16>
    %c0_19 = arith.constant 0 : index
    %c0_20 = arith.constant 0 : index
    %36 = vector.load %arg9[%c0_19, %c0_20] : memref<128x128xbf16, #tpu.memory_space<vmem>>, vector<128x128xbf16>
    %cst_21 = arith.constant dense<0.000000e+00> : vector<32x128xf32>
    %37 = tpu.matmul %35, %36, %cst_21 {dimension_numbers = #tpu.dot_dimension_numbers<[1], [0], [0], [1], [0, 0, 1, 1], [], []>} : vector<32x128xbf16>, vector<128x128xbf16>, vector<32x128xf32> -> vector<32x128xf32>
    %c0_22 = arith.constant 0 : index
    %c0_23 = arith.constant 0 : index
    %38 = vector.load %arg10[%c0_22, %c0_23] : memref<1x128xf32, #tpu.memory_space<vmem>>, vector<1x128xf32>
    %39 = vector.broadcast %38 : vector<1x128xf32> to vector<32x128xf32>
    %40 = arith.addf %37, %39 : vector<32x128xf32>
    %41 = vector.shape_cast %40 : vector<32x128xf32> to vector<4x8x128xf32>
    %42 = arith.truncf %41 : vector<4x8x128xf32> to vector<4x8x128xbf16>
    %c0_24 = arith.constant 0 : index
    %c0_25 = arith.constant 0 : index
    %c0_26 = arith.constant 0 : index
    %43 = vector.load %arg12[%c0_24, %c0_25, %c0_26] : memref<4x8x128xbf16, #tpu.memory_space<vmem>>, vector<4x8x128xbf16>
    tpu.vector_store %arg12[%c0_24, %c0_25, %c0_26], %42 {strides = array<i32>} : memref<4x8x128xbf16, #tpu.memory_space<vmem>>, vector<4x8x128xbf16>,
    %c0_27 = arith.constant 0 : index
    %44 = memref.load %arg11[%c0_27] : memref<1xf32, #tpu.memory_space<smem>>
    %cst_28 = arith.constant 1.000000e+00 : f32
    %45 = arith.divf %cst_28, %44 : f32
    %46 = math.log %44 : f32
    %47 = vector.shape_cast %0 : vector<8x128xf32> to vector<1x8x128xf32>
    %48 = vector.broadcast %47 : vector<1x8x128xf32> to vector<4x8x128xf32>
    %49 = arith.subf %41, %48 : vector<4x8x128xf32>
    %50 = arith.mulf %49, %49 : vector<4x8x128xf32>
    %cst_29 = arith.constant dense<0.000000e+00> : vector<4x8xf32>
    %51 = vector.multi_reduction <add>, %50, %cst_29 [2] : vector<4x8x128xf32> to vector<4x8xf32>
    %52 = vector.shape_cast %51 : vector<4x8xf32> to vector<4x8x1xf32>
    %cst_30 = arith.constant 5.000000e-01 : f32
    %53 = arith.mulf %cst_30, %45 : f32
    %cst_31 = arith.constant 0.000000e+00 : f32
    %54 = arith.subf %cst_31, %53 : f32
    %55 = vector.broadcast %54 : f32 to vector<4x8x1xf32>
    %56 = arith.mulf %55, %52 : vector<4x8x1xf32>
    %cst_32 = arith.constant 6.400000e+01 : f32
    %57 = arith.mulf %cst_32, %46 : f32
    %58 = vector.broadcast %57 : f32 to vector<4x8x1xf32>
    %59 = arith.subf %56, %58 : vector<4x8x1xf32>
    %60 = arith.mulf %14, %14 : vector<8x128xf32>
    %61 = arith.mulf %18, %18 : vector<8x128xf32>
    %62 = arith.addf %60, %61 : vector<8x128xf32>
    %63 = arith.subf %62, %15 : vector<8x128xf32>
    %cst_33 = arith.constant 1.000000e+00 : f32
    %64 = vector.broadcast %cst_33 : f32 to vector<8x128xf32>
    %65 = arith.subf %63, %64 : vector<8x128xf32>
    %cst_34 = arith.constant dense<0.000000e+00> : vector<8xf32>
    %66 = vector.multi_reduction <add>, %65, %cst_34 [1] : vector<8x128xf32> to vector<8xf32>
    %67 = vector.shape_cast %66 : vector<8xf32> to vector<8x1xf32>
    %cst_35 = arith.constant 5.000000e-01 : f32
    %68 = vector.broadcast %cst_35 : f32 to vector<8x1xf32>
    %69 = arith.mulf %68, %67 : vector<8x1xf32>
    %70 = vector.shape_cast %69 : vector<8x1xf32> to vector<1x8x1xf32>
    %71 = vector.broadcast %70 : vector<1x8x1xf32> to vector<4x8x1xf32>
    %72 = arith.subf %59, %71 : vector<4x8x1xf32>
    %cst_36 = arith.constant dense<0xFF800000> : vector<8x1xf32>
    %73 = vector.multi_reduction <maximumf>, %72, %cst_36 [0] : vector<4x8x1xf32> to vector<8x1xf32>
    %74 = vector.shape_cast %73 : vector<8x1xf32> to vector<1x8x1xf32>
    %75 = vector.broadcast %74 : vector<1x8x1xf32> to vector<4x8x1xf32>
    %76 = arith.subf %72, %75 : vector<4x8x1xf32>
    %77 = math.exp %76 : vector<4x8x1xf32>
    %cst_37 = arith.constant dense<0.000000e+00> : vector<8x1xf32>
    %78 = vector.multi_reduction <add>, %77, %cst_37 [0] : vector<4x8x1xf32> to vector<8x1xf32>
    %79 = math.log %78 : vector<8x1xf32>
    %80 = arith.addf %73, %79 : vector<8x1xf32>
    %cst_38 = arith.constant 1.38629436 : f32
    %81 = vector.broadcast %cst_38 : f32 to vector<8x1xf32>
    %82 = arith.subf %80, %81 : vector<8x1xf32>
    %c8_i32 = arith.constant 8 : i32
    %83 = arith.muli %arg0, %c8_i32 : i32
    %84 = tpu.iota {dimensions = array<i32: 0>} : vector<8x1xi32>
    %85 = vector.broadcast %83 : i32 to vector<8x1xi32>
    %86 = arith.addi %85, %84 : vector<8x1xi32>
    %c2_i32 = arith.constant 2 : i32
    %87 = vector.broadcast %c2_i32 : i32 to vector<8x1xi32>
    %88 = arith.cmpi slt, %86, %87 : vector<8x1xi32>
    %89 = arith.extui %88 : vector<8x1xi1> to vector<8x1xi32>
    %90 = arith.sitofp %89 : vector<8x1xi32> to vector<8x1xf32>
    %91 = arith.mulf %82, %90 : vector<8x1xf32>
    %92 = vector.shape_cast %91 : vector<8x1xf32> to vector<1x8x1xf32>
    %cst_39 = arith.constant dense<0.000000e+00> : vector<1xf32>
    %93 = vector.multi_reduction <add>, %92, %cst_39 [1, 2] : vector<1x8x1xf32> to vector<1xf32>
    %94 = vector.shape_cast %93 : vector<1xf32> to vector<1x1x1xf32>
    %95 = vector.extract %94[0, 0, 0] : f32 from vector<1x1x1xf32>
    %96 = vector.shape_cast %90 : vector<8x1xf32> to vector<1x8x1xf32>
    %97 = vector.broadcast %96 : vector<1x8x1xf32> to vector<4x8x1xf32>
    %98 = arith.mulf %59, %97 : vector<4x8x1xf32>
    %99 = vector.shape_cast %98 : vector<4x8x1xf32> to vector<1x4x8x1xf32>
    %cst_40 = arith.constant dense<0.000000e+00> : vector<1xf32>
    %100 = vector.multi_reduction <add>, %99, %cst_40 [1, 2, 3] : vector<1x4x8x1xf32> to vector<1xf32>
    %101 = vector.shape_cast %100 : vector<1xf32> to vector<1x1x1x1xf32>
    %102 = vector.extract %101[0, 0, 0, 0] : f32 from vector<1x1x1x1xf32>
    %103 = arith.mulf %69, %90 : vector<8x1xf32>
    %104 = vector.shape_cast %103 : vector<8x1xf32> to vector<1x8x1xf32>
    %cst_41 = arith.constant dense<0.000000e+00> : vector<1xf32>
    %105 = vector.multi_reduction <add>, %104, %cst_41 [1, 2] : vector<1x8x1xf32> to vector<1xf32>
    %106 = vector.shape_cast %105 : vector<1xf32> to vector<1x1x1xf32>
    %107 = vector.extract %106[0, 0, 0] : f32 from vector<1x1x1xf32>
    %108 = tpu.iota {dimensions = array<i32: 0>} : vector<8x128xi32>
    %c0_i32 = arith.constant 0 : i32
    %109 = vector.broadcast %c0_i32 : i32 to vector<8x128xi32>
    %110 = arith.cmpi eq, %108, %109 : vector<8x128xi32>
    %cst_42 = arith.constant 0.000000e+00 : f32
    %111 = vector.broadcast %95 : f32 to vector<8x128xf32>
    %112 = vector.broadcast %cst_42 : f32 to vector<8x128xf32>
    %113 = arith.select %110, %111, %112 : vector<8x128xi1>, vector<8x128xf32>
    %c1_i32 = arith.constant 1 : i32
    %114 = vector.broadcast %c1_i32 : i32 to vector<8x128xi32>
    %115 = arith.cmpi eq, %108, %114 : vector<8x128xi32>
    %cst_43 = arith.constant 0.000000e+00 : f32
    %116 = vector.broadcast %102 : f32 to vector<8x128xf32>
    %117 = vector.broadcast %cst_43 : f32 to vector<8x128xf32>
    %118 = arith.select %115, %116, %117 : vector<8x128xi1>, vector<8x128xf32>
    %119 = arith.addf %113, %118 : vector<8x128xf32>
    %c2_i32_44 = arith.constant 2 : i32
    %120 = vector.broadcast %c2_i32_44 : i32 to vector<8x128xi32>
    %121 = arith.cmpi eq, %108, %120 : vector<8x128xi32>
    %cst_45 = arith.constant 0.000000e+00 : f32
    %122 = vector.broadcast %107 : f32 to vector<8x128xf32>
    %123 = vector.broadcast %cst_45 : f32 to vector<8x128xf32>
    %124 = arith.select %121, %122, %123 : vector<8x128xi1>, vector<8x128xf32>
    %125 = arith.addf %119, %124 : vector<8x128xf32>
    %126 = vector.shape_cast %125 : vector<8x128xf32> to vector<1x8x128xf32>
    %c0_46 = arith.constant 0 : index
    %c0_47 = arith.constant 0 : index
    %c0_48 = arith.constant 0 : index
    %127 = vector.load %arg13[%c0_46, %c0_47, %c0_48] : memref<1x8x128xf32, #tpu.memory_space<vmem>>, vector<1x8x128xf32>
    tpu.vector_store %arg13[%c0_46, %c0_47, %c0_48], %126 {strides = array<i32>} : memref<1x8x128xf32, #tpu.memory_space<vmem>>, vector<1x8x128xf32>,
    return
  }
  func.func @transform_0(%arg0: i32) -> (i32, i32) {
    %c0_i32 = arith.constant 0 : i32
    %c0_i32_0 = arith.constant 0 : i32
    return %arg0, %c0_i32 : i32, i32
  }
  func.func @transform_1(%arg0: i32) -> (i32, i32) {
    %c0_i32 = arith.constant 0 : i32
    %c0_i32_0 = arith.constant 0 : i32
    %c0_i32_1 = arith.constant 0 : i32
    return %c0_i32, %c0_i32_0 : i32, i32
  }
  func.func @transform_2(%arg0: i32) -> (i32, i32) {
    %c0_i32 = arith.constant 0 : i32
    %c0_i32_0 = arith.constant 0 : i32
    %c0_i32_1 = arith.constant 0 : i32
    return %c0_i32, %c0_i32_0 : i32, i32
  }
  func.func @transform_3(%arg0: i32) -> (i32, i32) {
    %c0_i32 = arith.constant 0 : i32
    %c0_i32_0 = arith.constant 0 : i32
    %c0_i32_1 = arith.constant 0 : i32
    return %c0_i32, %c0_i32_0 : i32, i32
  }
  func.func @transform_4(%arg0: i32) -> (i32, i32) {
    %c0_i32 = arith.constant 0 : i32
    %c0_i32_0 = arith.constant 0 : i32
    %c0_i32_1 = arith.constant 0 : i32
    return %c0_i32, %c0_i32_0 : i32, i32
  }
  func.func @transform_5(%arg0: i32) -> (i32, i32, i32) {
    %c0_i32 = arith.constant 0 : i32
    %c0_i32_0 = arith.constant 0 : i32
    %c0_i32_1 = arith.constant 0 : i32
    return %c0_i32, %arg0, %c0_i32_0 : i32, i32, i32
  }
  func.func @transform_6(%arg0: i32) -> (i32, i32) {
    %c0_i32 = arith.constant 0 : i32
    %c0_i32_0 = arith.constant 0 : i32
    %c0_i32_1 = arith.constant 0 : i32
    return %c0_i32, %c0_i32_0 : i32, i32
  }
  func.func @transform_7(%arg0: i32) -> (i32, i32) {
    %c0_i32 = arith.constant 0 : i32
    %c0_i32_0 = arith.constant 0 : i32
    %c0_i32_1 = arith.constant 0 : i32
    return %c0_i32, %c0_i32_0 : i32, i32
  }
  func.func @transform_8(%arg0: i32) -> (i32, i32) {
    %c0_i32 = arith.constant 0 : i32
    %c0_i32_0 = arith.constant 0 : i32
    %c0_i32_1 = arith.constant 0 : i32
    return %c0_i32, %c0_i32_0 : i32, i32
  }
  func.func @transform_9(%arg0: i32) -> (i32, i32) {
    %c0_i32 = arith.constant 0 : i32
    %c0_i32_0 = arith.constant 0 : i32
    %c0_i32_1 = arith.constant 0 : i32
    return %c0_i32, %c0_i32_0 : i32, i32
  }
  func.func @transform_10(%arg0: i32) -> i32 {
    %c0_i32 = arith.constant 0 : i32
    %c0_i32_0 = arith.constant 0 : i32
    return %c0_i32 : i32
  }
  func.func @transform_11(%arg0: i32) -> (i32, i32, i32) {
    %c0_i32 = arith.constant 0 : i32
    %c0_i32_0 = arith.constant 0 : i32
    %c0_i32_1 = arith.constant 0 : i32
    return %c0_i32, %arg0, %c0_i32_0 : i32, i32, i32
  }
  func.func @transform_12(%arg0: i32) -> (i32, i32, i32) {
    %c0_i32 = arith.constant 0 : i32
    %c0_i32_0 = arith.constant 0 : i32
    %c0_i32_1 = arith.constant 0 : i32
    return %arg0, %c0_i32, %c0_i32_0 : i32, i32, i32
  }
}

</mosaic_0001>

<llo_original>
// kernel: tpu_custom_call.1
$region0: #{tpu_custom_call.1}
  #allocation0 [shape = 'u32[]', space=smem, size = 0x4, offset = 0x4, fixed_abs, tag = 'smem constant byte address 0x4 - core index']
  #allocation1 [shape = 'u32[144,128]{1,0:T(1,128)}', space=vmem, size = 0x12000, scoped, tag = 'internal scratch']
  #allocation2 [shape = 'f32[1]{0:T(128)S(6)}', space=smem, size = 0x200, scoped, tag = 'scoped memory for tpu_custom_call.1']
  %s0 = inlined_call_operand.hbm [shape: f32[16,128], index: 0, kind: input, shape index: {}]
  %s1 = inlined_call_operand.hbm [shape: bf16[128,128], index: 1, kind: input, shape index: {}]
  %s2 = inlined_call_operand.vmem [shape: f32[1,128], index: 2, kind: input, shape index: {}]
  %s3 = inlined_call_operand.hbm [shape: bf16[128,256], index: 3, kind: input, shape index: {}]
  %s4 = inlined_call_operand.vmem [shape: f32[1,256], index: 4, kind: input, shape index: {}]
  %s5 = inlined_call_operand.hbm [shape: bf16[4,16,128], index: 5, kind: input, shape index: {}]
  %s6 = inlined_call_operand.hbm [shape: bf16[128,128], index: 6, kind: input, shape index: {}]
  %s7 = inlined_call_operand.vmem [shape: f32[1,128], index: 7, kind: input, shape index: {}]
  %s8 = inlined_call_operand.hbm [shape: bf16[128,128], index: 8, kind: input, shape index: {}]
  %s9 = inlined_call_operand.vmem [shape: f32[1,128], index: 9, kind: input, shape index: {}]
  %s10 = inlined_call_operand.<no memory space> [shape: f32[1], index: 10, kind: input, shape index: {}]
  %s11 = inlined_call_operand.hbm [shape: bf16[4,16,128], index: 11, kind: output, shape index: {0}]
  %s12 = inlined_call_operand.hbm [shape: f32[2,8,128], index: 12, kind: output, shape index: {1}]
  %13 = xla_tuple %s11, %s12
  %s14 = sld [smem:[#allocation0]]
  $region109: #{tpu_custom_call.1} parent=0
    _
  %s16 = ssub.s32 1, %s14
  %s17 = scalar_select 0, %s16, %s14
  %18 = sst [smem:[#allocation2]] %s10
  $region1: #{tpu_custom_call.1} parent=0
    #allocation3 [shape = 'u8[8192]{0}', space=vmem, size = 0x2000, scoped, tag = 'input window, operand 0']
    #allocation4 [shape = 's32[2]{0}', space=sflag, size = 0x8, scoped, tag = 'scoped memory for tpu_custom_call.1']
    #allocation5 [shape = 's32[2]{0}', space=sflag, size = 0x8, scoped, tag = 'scoped memory for tpu_custom_call.1']
    #allocation6 [shape = 'u8[32768]{0}', space=vmem, size = 0x8000, scoped, tag = 'input window, operand 1, single buffered']
    #allocation7 [shape = 's32[1]{0}', space=sflag, size = 0x4, scoped, tag = 'scoped memory for tpu_custom_call.1']
    #allocation8 [shape = 'u8[65536]{0}', space=vmem, size = 0x10000, scoped, tag = 'input window, operand 3, single buffered']
    #allocation9 [shape = 'u8[16384]{0}', space=vmem, size = 0x4000, scoped, tag = 'input window, operand 5']
    #allocation10 [shape = 's32[2]{0}', space=sflag, size = 0x8, scoped, tag = 'scoped memory for tpu_custom_call.1']
    #allocation11 [shape = 'u8[32768]{0}', space=vmem, size = 0x8000, scoped, tag = 'input window, operand 6, single buffered']
    #allocation12 [shape = 'u8[32768]{0}', space=vmem, size = 0x8000, scoped, tag = 'input window, operand 8, single buffered']
    #allocation13 [shape = 's32[1]{0}', space=sflag, size = 0x4, scoped, tag = 'scoped memory for tpu_custom_call.1']
    #allocation14 [shape = 'u8[16384]{0}', space=vmem, size = 0x4000, scoped, tag = 'output window, operand 0']
    #allocation15 [shape = 'u8[8192]{0}', space=vmem, size = 0x2000, scoped, tag = 'output window, operand 1']
    #allocation16 [shape = 's32[2]{0}', space=sflag, size = 0x8, scoped, tag = 'scoped memory for tpu_custom_call.1']
    %19 = vsyncpa [#allocation4], 0
    %s20 = scalar_lea.sflag [#allocation4], 1
    %21 = vsyncpa %s20, 0
    %22 = vsyncpa [#allocation7], 0
    %23 = vsyncpa [#allocation10], 0
    %s24 = scalar_lea.sflag [#allocation10], 1
    %25 = vsyncpa %s24, 0
    %26 = vsyncpa [#allocation13], 0
    %27 = vsyncpa [#allocation5], 0
    %s28 = scalar_lea.sflag [#allocation5], 1
    %29 = vsyncpa %s28, 0
    %30 = vsyncpa [#allocation16], 0
    %s31 = scalar_lea.sflag [#allocation16], 1
    %32 = vsyncpa %s31, 0
    loop: start=0, step=1, limit=4
    $region2: #{tpu_custom_call.1} parent=1 // loop_pre_header
      _
    $region3: #{tpu_custom_call.1} parent=1 // loop_header
      %s34 = sphi 0, %s38
      %p35 = scmp.ge.s32.totalorder %s34, 4
      %s44 = sphi 0, %s46
      %s47 = sphi 0, %s44
      %s48 = sphi 0, %s47
      %s64 = sphi 0, %s48
      %s68 = sphi 0, %s68
      %s70 = sphi 0, %s68
      %s71 = sphi 0, %s70
      %s85 = sphi 0, %s71
      %s89 = sphi 0, %s89
      %s91 = sphi 0, %s89
      %s92 = sphi 0, %s91
      %s106 = sphi 0, %s92
      %s110 = sphi 0, %s110
      %s112 = sphi 0, %s110
      %s113 = sphi 0, %s112
      %s127 = sphi 0, %s113
      %s131 = sphi 0, %s131
      %s133 = sphi 0, %s131
      %s134 = sphi 0, %s133
      %s148 = sphi 0, %s134
      %s154 = sphi 0, %s156
      %s157 = sphi 0, %s154
      %s158 = sphi 0, %s157
      %s174 = sphi 0, %s158
      %s178 = sphi 0, %s178
      %s180 = sphi 0, %s178
      %s181 = sphi 0, %s180
      %s195 = sphi 0, %s181
      %s199 = sphi 0, %s199
      %s201 = sphi 0, %s199
      %s202 = sphi 0, %s201
      %s216 = sphi 0, %s202
      %s220 = sphi 0, %s220
      %s222 = sphi 0, %s220
      %s223 = sphi 0, %s222
      %s237 = sphi 0, %s223
      %s241 = sphi 0, %s241
      %s243 = sphi 0, %s241
      %s244 = sphi 0, %s243
      %s258 = sphi 0, %s244
      %s262 = sphi 0, %s262
      %s264 = sphi 0, %s262
      %s265 = sphi 0, %s264
      %s279 = sphi 0, %s265
      %s285 = sphi 0, %s287
      %s288 = sphi 0, %s285
      %s289 = sphi 0, %s288
      %s305 = sphi 0, %s289
      %s311 = sphi 0, %s313
      %s314 = sphi 0, %s311
      %s315 = sphi 0, %s314
      %s331 = sphi 0, %s315
    $region4: #{tpu_custom_call.1} parent=1 // loop_header_branch
      %37 = sbr.rel (%p35) target = $region8
    $region5: #{tpu_custom_call.1} parent=1 // loop_body
      %s39 = ssub.s32 %s34, 1
      %s40 = ssub.s32 %s34, 2
      %s41 = sadd.s32 %s34, 1
      %s42 = ssub.s32 %s34, %s41
      %p43 = scmp.eq.s32.totalorder %s42, 0
      %s45 = sadd.s32 %s44, 1
      %s46 = scalar_select %p43, %s44, %s45
      %p49 = pneg %p43
      %p50 = scmp.eq.s32.totalorder %s34, 1
      %p51 = por %p49, %p50
      %p52 = scmp.ne.s32.totalorder %s44, %s47
      %p53 = scmp.eq.s32.totalorder %s34, 0
      %p54 = por %p52, %p53
      %p55 = scmp.ne.s32.totalorder %s44, %s47
      %p56 = scmp.eq.s32.totalorder %s39, 1
      %p57 = por %p55, %p56
      %p58 = scmp.ne.s32.totalorder %s47, %s48
      %p59 = scmp.eq.s32.totalorder %s39, 0
      %p60 = por %p58, %p59
      %p61 = scmp.ne.s32.totalorder %s47, %s48
      %p62 = scmp.eq.s32.totalorder %s40, 1
      %p63 = por %p61, %p62
      %p65 = scmp.ne.s32.totalorder %s48, %s64
      %p66 = scmp.eq.s32.totalorder %s40, 0
      %p67 = por %p65, %p66
      %s69 = sadd.s32 %s68, 1
      %p72 = scmp.eq.s32.totalorder %s34, 1
      %p73 = scmp.ne.s32.totalorder %s68, %s70
      %p74 = scmp.eq.s32.totalorder %s34, 0
      %p75 = por %p73, %p74
      %p76 = scmp.ne.s32.totalorder %s68, %s70
      %p77 = scmp.eq.s32.totalorder %s39, 1
      %p78 = por %p76, %p77
      %p79 = scmp.ne.s32.totalorder %s70, %s71
      %p80 = scmp.eq.s32.totalorder %s39, 0
      %p81 = por %p79, %p80
      %p82 = scmp.ne.s32.totalorder %s70, %s71
      %p83 = scmp.eq.s32.totalorder %s40, 1
      %p84 = por %p82, %p83
      %p86 = scmp.ne.s32.totalorder %s71, %s85
      %p87 = scmp.eq.s32.totalorder %s40, 0
      %p88 = por %p86, %p87
      %s90 = sadd.s32 %s89, 1
      %p93 = scmp.eq.s32.totalorder %s34, 1
      %p94 = scmp.ne.s32.totalorder %s89, %s91
      %p95 = scmp.eq.s32.totalorder %s34, 0
      %p96 = por %p94, %p95
      %p97 = scmp.ne.s32.totalorder %s89, %s91
      %p98 = scmp.eq.s32.totalorder %s39, 1
      %p99 = por %p97, %p98
      %p100 = scmp.ne.s32.totalorder %s91, %s92
      %p101 = scmp.eq.s32.totalorder %s39, 0
      %p102 = por %p100, %p101
      %p103 = scmp.ne.s32.totalorder %s91, %s92
      %p104 = scmp.eq.s32.totalorder %s40, 1
      %p105 = por %p103, %p104
      %p107 = scmp.ne.s32.totalorder %s92, %s106
      %p108 = scmp.eq.s32.totalorder %s40, 0
      %p109 = por %p107, %p108
      %s111 = sadd.s32 %s110, 1
      %p114 = scmp.eq.s32.totalorder %s34, 1
      %p115 = scmp.ne.s32.totalorder %s110, %s112
      %p116 = scmp.eq.s32.totalorder %s34, 0
      %p117 = por %p115, %p116
      %p118 = scmp.ne.s32.totalorder %s110, %s112
      %p119 = scmp.eq.s32.totalorder %s39, 1
      %p120 = por %p118, %p119
      %p121 = scmp.ne.s32.totalorder %s112, %s113
      %p122 = scmp.eq.s32.totalorder %s39, 0
      %p123 = por %p121, %p122
      %p124 = scmp.ne.s32.totalorder %s112, %s113
      %p125 = scmp.eq.s32.totalorder %s40, 1
      %p126 = por %p124, %p125
      %p128 = scmp.ne.s32.totalorder %s113, %s127
      %p129 = scmp.eq.s32.totalorder %s40, 0
      %p130 = por %p128, %p129
      %s132 = sadd.s32 %s131, 1
      %p135 = scmp.eq.s32.totalorder %s34, 1
      %p136 = scmp.ne.s32.totalorder %s131, %s133
      %p137 = scmp.eq.s32.totalorder %s34, 0
      %p138 = por %p136, %p137
      %p139 = scmp.ne.s32.totalorder %s131, %s133
      %p140 = scmp.eq.s32.totalorder %s39, 1
      %p141 = por %p139, %p140
      %p142 = scmp.ne.s32.totalorder %s133, %s134
      %p143 = scmp.eq.s32.totalorder %s39, 0
      %p144 = por %p142, %p143
      %p145 = scmp.ne.s32.totalorder %s133, %s134
      %p146 = scmp.eq.s32.totalorder %s40, 1
      %p147 = por %p145, %p146
      %p149 = scmp.ne.s32.totalorder %s134, %s148
      %p150 = scmp.eq.s32.totalorder %s40, 0
      %p151 = por %p149, %p150
      %s152 = ssub.s32 %s34, %s41
      %p153 = scmp.eq.s32.totalorder %s152, 0
      %s155 = sadd.s32 %s154, 1
      %s156 = scalar_select %p153, %s154, %s155
      %p159 = pneg %p153
      %p160 = scmp.eq.s32.totalorder %s34, 1
      %p161 = por %p159, %p160
      %p162 = scmp.ne.s32.totalorder %s154, %s157
      %p163 = scmp.eq.s32.totalorder %s34, 0
      %p164 = por %p162, %p163
      %p165 = scmp.ne.s32.totalorder %s154, %s157
      %p166 = scmp.eq.s32.totalorder %s39, 1
      %p167 = por %p165, %p166
      %p168 = scmp.ne.s32.totalorder %s157, %s158
      %p169 = scmp.eq.s32.totalorder %s39, 0
      %p170 = por %p168, %p169
      %p171 = scmp.ne.s32.totalorder %s157, %s158
      %p172 = scmp.eq.s32.totalorder %s40, 1
      %p173 = por %p171, %p172
      %p175 = scmp.ne.s32.totalorder %s158, %s174
      %p176 = scmp.eq.s32.totalorder %s40, 0
      %p177 = por %p175, %p176
      %s179 = sadd.s32 %s178, 1
      %p182 = scmp.eq.s32.totalorder %s34, 1
      %p183 = scmp.ne.s32.totalorder %s178, %s180
      %p184 = scmp.eq.s32.totalorder %s34, 0
      %p185 = por %p183, %p184
      %p186 = scmp.ne.s32.totalorder %s178, %s180
      %p187 = scmp.eq.s32.totalorder %s39, 1
      %p188 = por %p186, %p187
      %p189 = scmp.ne.s32.totalorder %s180, %s181
      %p190 = scmp.eq.s32.totalorder %s39, 0
      %p191 = por %p189, %p190
      %p192 = scmp.ne.s32.totalorder %s180, %s181
      %p193 = scmp.eq.s32.totalorder %s40, 1
      %p194 = por %p192, %p193
      %p196 = scmp.ne.s32.totalorder %s181, %s195
      %p197 = scmp.eq.s32.totalorder %s40, 0
      %p198 = por %p196, %p197
      %s200 = sadd.s32 %s199, 1
      %p203 = scmp.eq.s32.totalorder %s34, 1
      %p204 = scmp.ne.s32.totalorder %s199, %s201
      %p205 = scmp.eq.s32.totalorder %s34, 0
      %p206 = por %p204, %p205
      %p207 = scmp.ne.s32.totalorder %s199, %s201
      %p208 = scmp.eq.s32.totalorder %s39, 1
      %p209 = por %p207, %p208
      %p210 = scmp.ne.s32.totalorder %s201, %s202
      %p211 = scmp.eq.s32.totalorder %s39, 0
      %p212 = por %p210, %p211
      %p213 = scmp.ne.s32.totalorder %s201, %s202
      %p214 = scmp.eq.s32.totalorder %s40, 1
      %p215 = por %p213, %p214
      %p217 = scmp.ne.s32.totalorder %s202, %s216
      %p218 = scmp.eq.s32.totalorder %s40, 0
      %p219 = por %p217, %p218
      %s221 = sadd.s32 %s220, 1
      %p224 = scmp.eq.s32.totalorder %s34, 1
      %p225 = scmp.ne.s32.totalorder %s220, %s222
      %p226 = scmp.eq.s32.totalorder %s34, 0
      %p227 = por %p225, %p226
      %p228 = scmp.ne.s32.totalorder %s220, %s222
      %p229 = scmp.eq.s32.totalorder %s39, 1
      %p230 = por %p228, %p229
      %p231 = scmp.ne.s32.totalorder %s222, %s223
      %p232 = scmp.eq.s32.totalorder %s39, 0
      %p233 = por %p231, %p232
      %p234 = scmp.ne.s32.totalorder %s222, %s223
      %p235 = scmp.eq.s32.totalorder %s40, 1
      %p236 = por %p234, %p235
      %p238 = scmp.ne.s32.totalorder %s223, %s237
      %p239 = scmp.eq.s32.totalorder %s40, 0
      %p240 = por %p238, %p239
      %s242 = sadd.s32 %s241, 1
      %p245 = scmp.eq.s32.totalorder %s34, 1
      %p246 = scmp.ne.s32.totalorder %s241, %s243
      %p247 = scmp.eq.s32.totalorder %s34, 0
      %p248 = por %p246, %p247
      %p249 = scmp.ne.s32.totalorder %s241, %s243
      %p250 = scmp.eq.s32.totalorder %s39, 1
      %p251 = por %p249, %p250
      %p252 = scmp.ne.s32.totalorder %s243, %s244
      %p253 = scmp.eq.s32.totalorder %s39, 0
      %p254 = por %p252, %p253
      %p255 = scmp.ne.s32.totalorder %s243, %s244
      %p256 = scmp.eq.s32.totalorder %s40, 1
      %p257 = por %p255, %p256
      %p259 = scmp.ne.s32.totalorder %s244, %s258
      %p260 = scmp.eq.s32.totalorder %s40, 0
      %p261 = por %p259, %p260
      %s263 = sadd.s32 %s262, 1
      %p266 = scmp.eq.s32.totalorder %s34, 1
      %p267 = scmp.ne.s32.totalorder %s262, %s264
      %p268 = scmp.eq.s32.totalorder %s34, 0
      %p269 = por %p267, %p268
      %p270 = scmp.ne.s32.totalorder %s262, %s264
      %p271 = scmp.eq.s32.totalorder %s39, 1
      %p272 = por %p270, %p271
      %p273 = scmp.ne.s32.totalorder %s264, %s265
      %p274 = scmp.eq.s32.totalorder %s39, 0
      %p275 = por %p273, %p274
      %p276 = scmp.ne.s32.totalorder %s264, %s265
      %p277 = scmp.eq.s32.totalorder %s40, 1
      %p278 = por %p276, %p277
      %p280 = scmp.ne.s32.totalorder %s265, %s279
      %p281 = scmp.eq.s32.totalorder %s40, 0
      %p282 = por %p280, %p281
      %s283 = ssub.s32 %s34, %s41
      %p284 = scmp.eq.s32.totalorder %s283, 0
      %s286 = sadd.s32 %s285, 1
      %s287 = scalar_select %p284, %s285, %s286
      %p290 = pneg %p284
      %p291 = scmp.eq.s32.totalorder %s34, 1
      %p292 = por %p290, %p291
      %p293 = scmp.ne.s32.totalorder %s285, %s288
      %p294 = scmp.eq.s32.totalorder %s34, 0
      %p295 = por %p293, %p294
      %p296 = scmp.ne.s32.totalorder %s285, %s288
      %p297 = scmp.eq.s32.totalorder %s39, 1
      %p298 = por %p296, %p297
      %p299 = scmp.ne.s32.totalorder %s288, %s289
      %p300 = scmp.eq.s32.totalorder %s39, 0
      %p301 = por %p299, %p300
      %p302 = scmp.ne.s32.totalorder %s288, %s289
      %p303 = scmp.eq.s32.totalorder %s40, 1
      %p304 = por %p302, %p303
      %p306 = scmp.ne.s32.totalorder %s289, %s305
      %p307 = scmp.eq.s32.totalorder %s40, 0
      %p308 = por %p306, %p307
      %s309 = ssub.s32 %s34, %s41
      %p310 = scmp.eq.s32.totalorder %s309, 0
      %s312 = sadd.s32 %s311, 1
      %s313 = scalar_select %p310, %s311, %s312
      %p316 = pneg %p310
      %p317 = scmp.eq.s32.totalorder %s34, 1
      %p318 = por %p316, %p317
      %p319 = scmp.ne.s32.totalorder %s311, %s314
      %p320 = scmp.eq.s32.totalorder %s34, 0
      %p321 = por %p319, %p320
      %p322 = scmp.ne.s32.totalorder %s311, %s314
      %p323 = scmp.eq.s32.totalorder %s39, 1
      %p324 = por %p322, %p323
      %p325 = scmp.ne.s32.totalorder %s314, %s315
      %p326 = scmp.eq.s32.totalorder %s39, 0
      %p327 = por %p325, %p326
      %p328 = scmp.ne.s32.totalorder %s314, %s315
      %p329 = scmp.eq.s32.totalorder %s40, 1
      %p330 = por %p328, %p329
      %p332 = scmp.ne.s32.totalorder %s315, %s331
      %p333 = scmp.eq.s32.totalorder %s40, 0
      %p334 = por %p332, %p333
      %p335 = scmp.le.s32.totalorder 1, %s34
      %p336 = scmp.lt.s32.totalorder %s34, 3
      %p337 = pnand %p335, %p336
      %p338 = pneg %p337
      // Predicated region
      $region9: #{tpu_custom_call.1} parent=5 // pred_check
        _
      $region10: #{tpu_custom_call.1} parent=5 // pred_check_branch
        %340 = sbr.rel (%p337) target = $region12
      $region11: #{tpu_custom_call.1} parent=5 // pred_region
        %s341 = ssub.s32 %s34, 1
        // Predicated region
        $region13: #{tpu_custom_call.1} parent=11 // pred_check
          %p342 = pneg %p81
        $region14: #{tpu_custom_call.1} parent=11 // pred_check_branch
          %344 = sbr.rel (%p342) target = $region16
        $region15: #{tpu_custom_call.1} parent=11 // pred_region
          %s346 = ssub.s32 1024, 1024
          %347 = vsyncadd [#allocation7], %s346
          %s348 = sshll.u32 [#allocation6], 4
          %s349 = int_to_ptr.vmem [resolvable:$true] %s348
          %354 = dma.hbm_to_vmem [thread:$0]  %s1, 1024, %s349, [#allocation7], 64, 64, 4
        $region16: #{tpu_custom_call.1} parent=11 // pred_fallthru
          _
        // Predicated region
        $region17: #{tpu_custom_call.1} parent=11 // pred_check
          %p355 = pneg %p102
        $region18: #{tpu_custom_call.1} parent=11 // pred_check_branch
          %357 = sbr.rel (%p355) target = $region20
        $region19: #{tpu_custom_call.1} parent=11 // pred_region
          _
        $region20: #{tpu_custom_call.1} parent=11 // pred_fallthru
          _
        // Predicated region
        $region21: #{tpu_custom_call.1} parent=11 // pred_check
          %p358 = pneg %p123
        $region22: #{tpu_custom_call.1} parent=11 // pred_check_branch
          %360 = sbr.rel (%p358) target = $region24
        $region23: #{tpu_custom_call.1} parent=11 // pred_region
          %s362 = ssub.s32 2048, 2048
          %363 = vsyncadd [#allocation7], %s362
          %s364 = sshll.u32 [#allocation8], 4
          %s365 = int_to_ptr.vmem [resolvable:$true] %s364
          %370 = dma.hbm_to_vmem [thread:$0]  %s3, 2048, %s365, [#allocation7], 128, 128, 8
        $region24: #{tpu_custom_call.1} parent=11 // pred_fallthru
          _
        // Predicated region
        $region25: #{tpu_custom_call.1} parent=11 // pred_check
          %p371 = pneg %p144
        $region26: #{tpu_custom_call.1} parent=11 // pred_check_branch
          %373 = sbr.rel (%p371) target = $region28
        $region27: #{tpu_custom_call.1} parent=11 // pred_region
          _
        $region28: #{tpu_custom_call.1} parent=11 // pred_fallthru
          _
        // Predicated region
        $region29: #{tpu_custom_call.1} parent=11 // pred_check
          %p374 = pneg %p191
        $region30: #{tpu_custom_call.1} parent=11 // pred_check_branch
          %376 = sbr.rel (%p374) target = $region32
        $region31: #{tpu_custom_call.1} parent=11 // pred_region
          %s378 = ssub.s32 1024, 1024
          %379 = vsyncadd [#allocation10], %s378
          %s380 = sshll.u32 [#allocation11], 4
          %s381 = int_to_ptr.vmem [resolvable:$true] %s380
          %386 = dma.hbm_to_vmem [thread:$0]  %s6, 1024, %s381, [#allocation10], 64, 64, 4
        $region32: #{tpu_custom_call.1} parent=11 // pred_fallthru
          _
        // Predicated region
        $region33: #{tpu_custom_call.1} parent=11 // pred_check
          %p387 = pneg %p212
        $region34: #{tpu_custom_call.1} parent=11 // pred_check_branch
          %389 = sbr.rel (%p387) target = $region36
        $region35: #{tpu_custom_call.1} parent=11 // pred_region
          _
        $region36: #{tpu_custom_call.1} parent=11 // pred_fallthru
          _
        // Predicated region
        $region37: #{tpu_custom_call.1} parent=11 // pred_check
          %p390 = pneg %p233
        $region38: #{tpu_custom_call.1} parent=11 // pred_check_branch
          %392 = sbr.rel (%p390) target = $region40
        $region39: #{tpu_custom_call.1} parent=11 // pred_region
          %s394 = ssub.s32 1024, 1024
          %395 = vsyncadd [#allocation13], %s394
          %s396 = sshll.u32 [#allocation12], 4
          %s397 = int_to_ptr.vmem [resolvable:$true] %s396
          %402 = dma.hbm_to_vmem [thread:$0]  %s8, 1024, %s397, [#allocation13], 64, 64, 4
        $region40: #{tpu_custom_call.1} parent=11 // pred_fallthru
          _
        // Predicated region
        $region41: #{tpu_custom_call.1} parent=11 // pred_check
          %p403 = pneg %p254
        $region42: #{tpu_custom_call.1} parent=11 // pred_check_branch
          %405 = sbr.rel (%p403) target = $region44
        $region43: #{tpu_custom_call.1} parent=11 // pred_region
          _
        $region44: #{tpu_custom_call.1} parent=11 // pred_fallthru
          _
        // Predicated region
        $region45: #{tpu_custom_call.1} parent=11 // pred_check
          %p406 = pneg %p275
        $region46: #{tpu_custom_call.1} parent=11 // pred_check_branch
          %408 = sbr.rel (%p406) target = $region48
        $region47: #{tpu_custom_call.1} parent=11 // pred_region
          _
        $region48: #{tpu_custom_call.1} parent=11 // pred_fallthru
          _
      $region12: #{tpu_custom_call.1} parent=5 // pred_fallthru
        _
      %p409 = scmp.lt.s32.totalorder %s34, 2
      // Predicated region
      $region49: #{tpu_custom_call.1} parent=5 // pred_check
        %p410 = pneg %p409
      $region50: #{tpu_custom_call.1} parent=5 // pred_check_branch
        %412 = sbr.rel (%p410) target = $region52
      $region51: #{tpu_custom_call.1} parent=5 // pred_region
        // Predicated region
        $region53: #{tpu_custom_call.1} parent=51 // pred_check
          %p413 = pneg %p54
        $region54: #{tpu_custom_call.1} parent=51 // pred_check_branch
          %415 = sbr.rel (%p413) target = $region56
        $region55: #{tpu_custom_call.1} parent=51 // pred_region
          %s416 = sand.u32 %s44, 1
          %s417 = scalar_lea.sflag [#allocation4], %s416
          %s418 = sand.u32 %s44, 1
          %s419 = smul.addr %s418, 8
          %s420 = scalar_lea.vmem [#allocation3], %s419
          %s422 = ssub.s32 128, 128
          %423 = vsyncadd %s417, %s422
          %s424 = smul.addr %s34, 128
          %s425 = scalar_lea.hbm %s0, %s424
          %s427 = sshll.u32 %s420, 4
          %s428 = int_to_ptr.vmem [resolvable:$true] %s427
          %430 = dma.hbm_to_vmem [thread:$0]  %s425, 128, %s428, %s417
        $region56: #{tpu_custom_call.1} parent=51 // pred_fallthru
          _
        // Predicated region
        $region57: #{tpu_custom_call.1} parent=51 // pred_check
          %p431 = pneg %p164
        $region58: #{tpu_custom_call.1} parent=51 // pred_check_branch
          %433 = sbr.rel (%p431) target = $region60
        $region59: #{tpu_custom_call.1} parent=51 // pred_region
          %s434 = sand.u32 %s34, 1
          %s435 = scalar_lea.sflag [#allocation10], %s434
          %s436 = sand.u32 %s154, 1
          %s437 = smul.addr %s436, 16
          %s438 = scalar_lea.vmem [#allocation9], %s437
          %s440 = ssub.s32 256, 256
          %441 = vsyncadd %s435, %s440
          %s442 = smul.addr %s34, 64
          %s443 = scalar_lea.hbm %s5, %s442
          %s444 = sshll.u32 %s438, 4
          %s445 = int_to_ptr.vmem [resolvable:$true] %s444
          %450 = dma.hbm_to_vmem [thread:$0]  %s443, 256, %s445, %s435, 128, 64, 4
        $region60: #{tpu_custom_call.1} parent=51 // pred_fallthru
          _
      $region52: #{tpu_custom_call.1} parent=5 // pred_fallthru
        _
      %p451 = scmp.le.s32.totalorder 1, %s34
      %p452 = scmp.lt.s32.totalorder %s34, 3
      %p453 = pnand %p451, %p452
      %p454 = pneg %p453
      // Predicated region
      $region61: #{tpu_custom_call.1} parent=5 // pred_check
        _
      $region62: #{tpu_custom_call.1} parent=5 // pred_check_branch
        %456 = sbr.rel (%p453) target = $region64
      $region63: #{tpu_custom_call.1} parent=5 // pred_region
        %s457 = ssub.s32 %s34, 1
        %s458 = sand.u32 %s47, 1
        %s459 = scalar_lea.sflag [#allocation4], %s458
        %s460 = sand.u32 %s47, 1
        %s461 = smul.addr %s460, 8
        %s462 = scalar_lea.vmem [#allocation3], %s461
        // Predicated region
        $region65: #{tpu_custom_call.1} parent=63 // pred_check
          %p463 = pneg %p60
        $region66: #{tpu_custom_call.1} parent=63 // pred_check_branch
          %465 = sbr.rel (%p463) target = $region68
        $region67: #{tpu_custom_call.1} parent=63 // pred_region
          %466 = dma.done %s459, 128
        $region68: #{tpu_custom_call.1} parent=63 // pred_fallthru
          _
        // Predicated region
        $region69: #{tpu_custom_call.1} parent=63 // pred_check
          %p467 = pneg %p81
        $region70: #{tpu_custom_call.1} parent=63 // pred_check_branch
          %469 = sbr.rel (%p467) target = $region72
        $region71: #{tpu_custom_call.1} parent=63 // pred_region
          %470 = dma.done [#allocation7], 1024
        $region72: #{tpu_custom_call.1} parent=63 // pred_fallthru
          _
        // Predicated region
        $region73: #{tpu_custom_call.1} parent=63 // pred_check
          %p471 = pneg %p123
        $region74: #{tpu_custom_call.1} parent=63 // pred_check_branch
          %473 = sbr.rel (%p471) target = $region76
        $region75: #{tpu_custom_call.1} parent=63 // pred_region
          %474 = dma.done [#allocation7], 2048
        $region76: #{tpu_custom_call.1} parent=63 // pred_fallthru
          _
        %s475 = sand.u32 %s39, 1
        %s476 = scalar_lea.sflag [#allocation10], %s475
        %s477 = sand.u32 %s157, 1
        %s478 = smul.addr %s477, 16
        %s479 = scalar_lea.vmem [#allocation9], %s478
        // Predicated region
        $region77: #{tpu_custom_call.1} parent=63 // pred_check
          %p480 = pneg %p170
        $region78: #{tpu_custom_call.1} parent=63 // pred_check_branch
          %482 = sbr.rel (%p480) target = $region80
        $region79: #{tpu_custom_call.1} parent=63 // pred_region
          %483 = dma.done %s476, 256
        $region80: #{tpu_custom_call.1} parent=63 // pred_fallthru
          _
        // Predicated region
        $region81: #{tpu_custom_call.1} parent=63 // pred_check
          %p484 = pneg %p191
        $region82: #{tpu_custom_call.1} parent=63 // pred_check_branch
          %486 = sbr.rel (%p484) target = $region84
        $region83: #{tpu_custom_call.1} parent=63 // pred_region
          %487 = dma.done [#allocation10], 1024
        $region84: #{tpu_custom_call.1} parent=63 // pred_fallthru
          _
        // Predicated region
        $region85: #{tpu_custom_call.1} parent=63 // pred_check
          %p488 = pneg %p233
        $region86: #{tpu_custom_call.1} parent=63 // pred_check_branch
          %490 = sbr.rel (%p488) target = $region88
        $region87: #{tpu_custom_call.1} parent=63 // pred_region
          %491 = dma.done [#allocation13], 1024
        $region88: #{tpu_custom_call.1} parent=63 // pred_fallthru
          _
        %s492 = sand.u32 %s47, 1
        %s493 = scalar_lea.sflag [#allocation4], %s492
        %s494 = sand.u32 %s47, 1
        %s495 = smul.addr %s494, 8
        %s496 = scalar_lea.vmem [#allocation3], %s495
        %p497 = pneg %p60
        %p498 = pneg %p57
        %p499 = pneg %p81
        %p500 = pneg %p78
        %p501 = pneg %p102
        %p502 = pneg %p99
        %p503 = pneg %p123
        %p504 = pneg %p120
        %p505 = pneg %p144
        %p506 = pneg %p141
        %s507 = sand.u32 %s39, 1
        %s508 = scalar_lea.sflag [#allocation10], %s507
        %s509 = sand.u32 %s157, 1
        %s510 = smul.addr %s509, 16
        %s511 = scalar_lea.vmem [#allocation9], %s510
        %p512 = pneg %p170
        %p513 = pneg %p167
        %p514 = pneg %p191
        %p515 = pneg %p188
        %p516 = pneg %p212
        %p517 = pneg %p209
        %p518 = pneg %p233
        %p519 = pneg %p230
        %p520 = pneg %p254
        %p521 = pneg %p251
        %p522 = pneg %p275
        %p523 = pneg %p272
        %p524 = pneg %p301
        %p525 = pneg %p298
        %s526 = sand.u32 %s288, 1
        %s527 = scalar_lea.sflag [#allocation5], %s526
        %s528 = sand.u32 %s288, 1
        %s529 = smul.addr %s528, 16
        %s530 = scalar_lea.vmem [#allocation14], %s529
        %p531 = pneg %p327
        %p532 = pneg %p324
        %s533 = sand.u32 %s314, 1
        %s534 = scalar_lea.sflag [#allocation16], %s533
        %s535 = sand.u32 %s314, 1
        %s536 = smul.addr %s535, 8
        %s537 = scalar_lea.vmem [#allocation15], %s536
        %v539 = vld [vmem:[%s462] sm:$0xff]
        %v540 = vpack.c.bf16 %v539, %v539
        %v541 = vld [vmem:[#allocation6] sm:$0xf]
        %v542 = vld [vmem:[#allocation6 + $0x4] sm:$0xf]
        %v543 = vld [vmem:[#allocation6 + $0x8] sm:$0xf]
        %v544 = vld [vmem:[#allocation6 + $0xc] sm:$0xf]
        %v545 = vld [vmem:[#allocation6 + $0x10] sm:$0xf]
        %v546 = vld [vmem:[#allocation6 + $0x14] sm:$0xf]
        %v547 = vld [vmem:[#allocation6 + $0x18] sm:$0xf]
        %v548 = vld [vmem:[#allocation6 + $0x1c] sm:$0xf]
        %v549 = vld [vmem:[#allocation6 + $0x20] sm:$0xf]
        %v550 = vld [vmem:[#allocation6 + $0x24] sm:$0xf]
        %v551 = vld [vmem:[#allocation6 + $0x28] sm:$0xf]
        %v552 = vld [vmem:[#allocation6 + $0x2c] sm:$0xf]
        %v553 = vld [vmem:[#allocation6 + $0x30] sm:$0xf]
        %v554 = vld [vmem:[#allocation6 + $0x34] sm:$0xf]
        %v555 = vld [vmem:[#allocation6 + $0x38] sm:$0xf]
        %v556 = vld [vmem:[#allocation6 + $0x3c] sm:$0xf]
        %v557 = vld [vmem:[%s2] sm:$0x1]
        %v559 = vlaneseq
        %v560 = vshrl.u32 %v559, 7
        %v561 = vsub.s32 0, %v560
        %v562 = vrot.slane %v557, %v561
        %v580 = vunpack.c.l.b16 %v541
        %v581 = vunpack.c.l.b16 %v542
        %v582 = vunpack.c.l.b16 %v543
        %v583 = vunpack.c.l.b16 %v544
        %v584 = vunpack.c.l.b16 %v545
        %v585 = vunpack.c.l.b16 %v546
        %v586 = vunpack.c.l.b16 %v547
        %v587 = vunpack.c.l.b16 %v548
        %v588 = vunpack.c.l.b16 %v549
        %v589 = vunpack.c.l.b16 %v550
        %v590 = vunpack.c.l.b16 %v551
        %v591 = vunpack.c.l.b16 %v552
        %v592 = vunpack.c.l.b16 %v553
        %v593 = vunpack.c.l.b16 %v554
        %v594 = vunpack.c.l.b16 %v555
        %v595 = vunpack.c.l.b16 %v556
        %v596 = vpack.c.b16 %v581, %v580
        %v597 = vpack.c.b16 %v583, %v582
        %v598 = vpack.c.b16 %v585, %v584
        %v599 = vpack.c.b16 %v587, %v586
        %v600 = vpack.c.b16 %v589, %v588
        %v601 = vpack.c.b16 %v591, %v590
        %v602 = vpack.c.b16 %v593, %v592
        %v603 = vpack.c.b16 %v595, %v594
        %612 = vmatprep.subr.bf16.mxu0 0
        %613 = vmatpush1.bf16.msra.mxu0 %v603
        %614 = vmatprep.subr.bf16.mxu0 0
        %615 = vmatpush1.bf16.msra.mxu0 %v602
        %616 = vmatprep.subr.bf16.mxu0 0
        %617 = vmatpush1.bf16.msra.mxu0 %v601
        %618 = vmatprep.subr.bf16.mxu0 0
        %619 = vmatpush1.bf16.msra.mxu0 %v600
        %620 = vmatprep.subr.bf16.mxu0 0
        %621 = vmatpush1.bf16.msra.mxu0 %v599
        %622 = vmatprep.subr.bf16.mxu0 0
        %623 = vmatpush1.bf16.msra.mxu0 %v598
        %624 = vmatprep.subr.bf16.mxu0 0
        %625 = vmatpush1.bf16.msra.mxu0 %v597
        %626 = vmatprep.subr.bf16.mxu0 0
        %627 = vmatpush1.bf16.msra.mxu0 %v596
        %628 = vmatprep.subr.bf16.mxu0 0
        %629 = vmatpush2.bf16.msra.mxu0 0
        %630 = vmatprep.subr.bf16.mxu0 0
        %631 = vmatpush2.bf16.msra.mxu0 0
        %632 = vmatprep.subr.bf16.mxu0 0
        %633 = vmatpush2.bf16.msra.mxu0 0
        %634 = vmatprep.subr.bf16.mxu0 0
        %635 = vmatpush2.bf16.msra.mxu0 0
        %636 = vmatprep.subr.bf16.mxu0 0
        %637 = vmatpush2.bf16.msra.mxu0 0
        %638 = vmatprep.subr.bf16.mxu0 0
        %639 = vmatpush2.bf16.msra.mxu0 0
        %640 = vmatprep.subr.bf16.mxu0 0
        %641 = vmatpush2.bf16.msra.mxu0 0
        %642 = vmatprep.subr.bf16.mxu0 0
        %643 = vmatpush2.bf16.msra.mxu0 0
        %644 = vmatprep.mubr.bf16.mxu0 0
        %645 = vmatmul.mubr.bf16.gmra.mxu0 %v540
        %v646 = vpop.f32.mrf.mxu0
        %v647 = vadd.f32 %v562, %v646
        %v648 = vpop.f32.mrf.mxu0
        %v649 = vpop.f32.mrf.mxu0
        %v650 = vpop.f32.mrf.mxu0
        %651 = vdwg.mxu0
        %v652 = vpack.c.bf16 %v647, %v647
        %v653 = vtanh.bf16.pop %v652
        %v654 = vld [vmem:[#allocation8] sm:$0xff]
        %v655 = vld [vmem:[#allocation8 + $0x8] sm:$0xff]
        %v656 = vld [vmem:[#allocation8 + $0x10] sm:$0xff]
        %v657 = vld [vmem:[#allocation8 + $0x18] sm:$0xff]
        %v658 = vld [vmem:[#allocation8 + $0x20] sm:$0xff]
        %v659 = vld [vmem:[#allocation8 + $0x28] sm:$0xff]
        %v660 = vld [vmem:[#allocation8 + $0x30] sm:$0xff]
        %v661 = vld [vmem:[#allocation8 + $0x38] sm:$0xff]
        %v662 = vld [vmem:[#allocation8 + $0x40] sm:$0xff]
        %v663 = vld [vmem:[#allocation8 + $0x48] sm:$0xff]
        %v664 = vld [vmem:[#allocation8 + $0x50] sm:$0xff]
        %v665 = vld [vmem:[#allocation8 + $0x58] sm:$0xff]
        %v666 = vld [vmem:[#allocation8 + $0x60] sm:$0xff]
        %v667 = vld [vmem:[#allocation8 + $0x68] sm:$0xff]
        %v668 = vld [vmem:[#allocation8 + $0x70] sm:$0xff]
        %v669 = vld [vmem:[#allocation8 + $0x78] sm:$0xff]
        %v670 = vld [vmem:[%s4] sm:$0x3]
        %v672 = vlaneseq
        %v673 = vshrl.u32 %v672, 7
        %v674 = vsub.s32 0, %v673
        %v675 = vrot.slane %v670, %v674
        %v676 = vlaneseq
        %v677 = vshrl.u32 %v676, 7
        %v678 = vsub.s32 1, %v677
        %v679 = vrot.slane %v670, %v678
        %v698 = vunpack.c.l.b16 %v654
        %v699 = vunpack.c.h.b16 %v654
        %v700 = vunpack.c.l.b16 %v655
        %v701 = vunpack.c.h.b16 %v655
        %v702 = vunpack.c.l.b16 %v656
        %v703 = vunpack.c.h.b16 %v656
        %v704 = vunpack.c.l.b16 %v657
        %v705 = vunpack.c.h.b16 %v657
        %v706 = vunpack.c.l.b16 %v658
        %v707 = vunpack.c.h.b16 %v658
        %v708 = vunpack.c.l.b16 %v659
        %v709 = vunpack.c.h.b16 %v659
        %v710 = vunpack.c.l.b16 %v660
        %v711 = vunpack.c.h.b16 %v660
        %v712 = vunpack.c.l.b16 %v661
        %v713 = vunpack.c.h.b16 %v661
        %v714 = vunpack.c.l.b16 %v662
        %v715 = vunpack.c.h.b16 %v662
        %v716 = vunpack.c.l.b16 %v663
        %v717 = vunpack.c.h.b16 %v663
        %v718 = vunpack.c.l.b16 %v664
        %v719 = vunpack.c.h.b16 %v664
        %v720 = vunpack.c.l.b16 %v665
        %v721 = vunpack.c.h.b16 %v665
        %v722 = vunpack.c.l.b16 %v666
        %v723 = vunpack.c.h.b16 %v666
        %v724 = vunpack.c.l.b16 %v667
        %v725 = vunpack.c.h.b16 %v667
        %v726 = vunpack.c.l.b16 %v668
        %v727 = vunpack.c.h.b16 %v668
        %v728 = vunpack.c.l.b16 %v669
        %v729 = vunpack.c.h.b16 %v669
        %v730 = vpack.c.b16 %v700, %v698
        %v731 = vpack.c.b16 %v701, %v699
        %v732 = vpack.c.b16 %v704, %v702
        %v733 = vpack.c.b16 %v705, %v703
        %v734 = vpack.c.b16 %v708, %v706
        %v735 = vpack.c.b16 %v709, %v707
        %v736 = vpack.c.b16 %v712, %v710
        %v737 = vpack.c.b16 %v713, %v711
        %v738 = vpack.c.b16 %v716, %v714
        %v739 = vpack.c.b16 %v717, %v715
        %v740 = vpack.c.b16 %v720, %v718
        %v741 = vpack.c.b16 %v721, %v719
        %v742 = vpack.c.b16 %v724, %v722
        %v743 = vpack.c.b16 %v725, %v723
        %v744 = vpack.c.b16 %v728, %v726
        %v745 = vpack.c.b16 %v729, %v727
        %762 = vmatprep.subr.bf16.mxu0 %v745
        %763 = vmatpush1.bf16.msra.mxu0 %v744
        %764 = vmatprep.subr.bf16.mxu0 %v743
        %765 = vmatpush1.bf16.msra.mxu0 %v742
        %766 = vmatprep.subr.bf16.mxu0 %v741
        %767 = vmatpush1.bf16.msra.mxu0 %v740
        %768 = vmatprep.subr.bf16.mxu0 %v739
        %769 = vmatpush1.bf16.msra.mxu0 %v738
        %770 = vmatprep.subr.bf16.mxu0 %v737
        %771 = vmatpush1.bf16.msra.mxu0 %v736
        %772 = vmatprep.subr.bf16.mxu0 %v735
        %773 = vmatpush1.bf16.msra.mxu0 %v734
        %774 = vmatprep.subr.bf16.mxu0 %v733
        %775 = vmatpush1.bf16.msra.mxu0 %v732
        %776 = vmatprep.subr.bf16.mxu0 %v731
        %777 = vmatpush1.bf16.msra.mxu0 %v730
        %778 = vmatprep.subr.bf16.mxu0 0
        %779 = vmatpush2.bf16.msra.mxu0 0
        %780 = vmatprep.subr.bf16.mxu0 0
        %781 = vmatpush2.bf16.msra.mxu0 0
        %782 = vmatprep.subr.bf16.mxu0 0
        %783 = vmatpush2.bf16.msra.mxu0 0
        %784 = vmatprep.subr.bf16.mxu0 0
        %785 = vmatpush2.bf16.msra.mxu0 0
        %786 = vmatprep.subr.bf16.mxu0 0
        %787 = vmatpush2.bf16.msra.mxu0 0
        %788 = vmatprep.subr.bf16.mxu0 0
        %789 = vmatpush2.bf16.msra.mxu0 0
        %790 = vmatprep.subr.bf16.mxu0 0
        %791 = vmatpush2.bf16.msra.mxu0 0
        %792 = vmatprep.subr.bf16.mxu0 0
        %793 = vmatpush2.bf16.msra.mxu0 0
        %794 = vmatprep.mubr.bf16.mxu0 0
        %795 = vmatmul.mubr.bf16.gmra.mxu0 %v653
        %v796 = vpop.f32.mrf.mxu0
        %v797 = vadd.f32 %v675, %v796
        %v798 = vpop.f32.mrf.mxu0
        %v799 = vadd.f32 %v679, %v798
        %v800 = vpop.f32.mrf.mxu0
        %v801 = vpop.f32.mrf.mxu0
        %802 = vdwg.mxu0
        %v803 = vmul.f32 %v799, 0.5
        %v804 = vmul.f32 %v803, 1.442695
        %v805 = vpow.pop %v804
        %v806 = vld [vmem:[%s479] sm:$0xf]
        %v807 = vld [vmem:[%s479 + $0x4] sm:$0xf]
        %v808 = vld [vmem:[%s479 + $0x8] sm:$0xf]
        %v809 = vld [vmem:[%s479 + $0xc] sm:$0xf]
        %v810 = vunpack.c.l.bf16 %v806
        %v811 = vunpack.c.l.bf16 %v807
        %v812 = vunpack.c.l.bf16 %v808
        %v813 = vunpack.c.l.bf16 %v809
        %v814 = vmul.f32 %v805, %v810
        %v815 = vmul.f32 %v805, %v811
        %v816 = vmul.f32 %v805, %v812
        %v817 = vmul.f32 %v805, %v813
        %v818 = vadd.f32 %v797, %v814
        %v819 = vadd.f32 %v797, %v815
        %v820 = vadd.f32 %v797, %v816
        %v821 = vadd.f32 %v797, %v817
        %v822 = vpack.c.bf16 %v819, %v818
        %v823 = vpack.c.bf16 %v821, %v820
        %v824 = vld [vmem:[#allocation11] sm:$0xf]
        %v825 = vld [vmem:[#allocation11 + $0x4] sm:$0xf]
        %v826 = vld [vmem:[#allocation11 + $0x8] sm:$0xf]
        %v827 = vld [vmem:[#allocation11 + $0xc] sm:$0xf]
        %v828 = vld [vmem:[#allocation11 + $0x10] sm:$0xf]
        %v829 = vld [vmem:[#allocation11 + $0x14] sm:$0xf]
        %v830 = vld [vmem:[#allocation11 + $0x18] sm:$0xf]
        %v831 = vld [vmem:[#allocation11 + $0x1c] sm:$0xf]
        %v832 = vld [vmem:[#allocation11 + $0x20] sm:$0xf]
        %v833 = vld [vmem:[#allocation11 + $0x24] sm:$0xf]
        %v834 = vld [vmem:[#allocation11 + $0x28] sm:$0xf]
        %v835 = vld [vmem:[#allocation11 + $0x2c] sm:$0xf]
        %v836 = vld [vmem:[#allocation11 + $0x30] sm:$0xf]
        %v837 = vld [vmem:[#allocation11 + $0x34] sm:$0xf]
        %v838 = vld [vmem:[#allocation11 + $0x38] sm:$0xf]
        %v839 = vld [vmem:[#allocation11 + $0x3c] sm:$0xf]
        %v840 = vld [vmem:[%s7] sm:$0x1]
        %v842 = vlaneseq
        %v843 = vshrl.u32 %v842, 7
        %v844 = vsub.s32 0, %v843
        %v845 = vrot.slane %v840, %v844
        %v863 = vunpack.c.l.b16 %v824
        %v864 = vunpack.c.l.b16 %v825
        %v865 = vunpack.c.l.b16 %v826
        %v866 = vunpack.c.l.b16 %v827
        %v867 = vunpack.c.l.b16 %v828
        %v868 = vunpack.c.l.b16 %v829
        %v869 = vunpack.c.l.b16 %v830
        %v870 = vunpack.c.l.b16 %v831
        %v871 = vunpack.c.l.b16 %v832
        %v872 = vunpack.c.l.b16 %v833
        %v873 = vunpack.c.l.b16 %v834
        %v874 = vunpack.c.l.b16 %v835
        %v875 = vunpack.c.l.b16 %v836
        %v876 = vunpack.c.l.b16 %v837
        %v877 = vunpack.c.l.b16 %v838
        %v878 = vunpack.c.l.b16 %v839
        %v879 = vpack.c.b16 %v864, %v863
        %v880 = vpack.c.b16 %v866, %v865
        %v881 = vpack.c.b16 %v868, %v867
        %v882 = vpack.c.b16 %v870, %v869
        %v883 = vpack.c.b16 %v872, %v871
        %v884 = vpack.c.b16 %v874, %v873
        %v885 = vpack.c.b16 %v876, %v875
        %v886 = vpack.c.b16 %v878, %v877
        %895 = vmatprep.subr.bf16.mxu0 0
        %896 = vmatpush1.bf16.msra.mxu0 %v886
        %897 = vmatprep.subr.bf16.mxu0 0
        %898 = vmatpush1.bf16.msra.mxu0 %v885
        %899 = vmatprep.subr.bf16.mxu0 0
        %900 = vmatpush1.bf16.msra.mxu0 %v884
        %901 = vmatprep.subr.bf16.mxu0 0
        %902 = vmatpush1.bf16.msra.mxu0 %v883
        %903 = vmatprep.subr.bf16.mxu0 0
        %904 = vmatpush1.bf16.msra.mxu0 %v882
        %905 = vmatprep.subr.bf16.mxu0 0
        %906 = vmatpush1.bf16.msra.mxu0 %v881
        %907 = vmatprep.subr.bf16.mxu0 0
        %908 = vmatpush1.bf16.msra.mxu0 %v880
        %909 = vmatprep.subr.bf16.mxu0 0
        %910 = vmatpush1.bf16.msra.mxu0 %v879
        %911 = vmatprep.subr.bf16.mxu0 0
        %912 = vmatpush2.bf16.msra.mxu0 0
        %913 = vmatprep.subr.bf16.mxu0 0
        %914 = vmatpush2.bf16.msra.mxu0 0
        %915 = vmatprep.subr.bf16.mxu0 0
        %916 = vmatpush2.bf16.msra.mxu0 0
        %917 = vmatprep.subr.bf16.mxu0 0
        %918 = vmatpush2.bf16.msra.mxu0 0
        %919 = vmatprep.subr.bf16.mxu0 0
        %920 = vmatpush2.bf16.msra.mxu0 0
        %921 = vmatprep.subr.bf16.mxu0 0
        %922 = vmatpush2.bf16.msra.mxu0 0
        %923 = vmatprep.subr.bf16.mxu0 0
        %924 = vmatpush2.bf16.msra.mxu0 0
        %925 = vmatprep.subr.bf16.mxu0 0
        %926 = vmatpush2.bf16.msra.mxu0 0
        %927 = vmatprep.mubr.bf16.mxu0 0
        %928 = vmatmul.mubr.bf16.gmra.mxu0 %v822
        %v929 = vpop.f32.mrf.mxu0
        %v930 = vadd.f32 %v845, %v929
        %v931 = vpop.f32.mrf.mxu0
        %v932 = vpop.f32.mrf.mxu0
        %v933 = vadd.f32 %v845, %v932
        %v934 = vpop.f32.mrf.mxu0
        %935 = vmatprep.mubr.bf16.mxu0 0
        %936 = vmatmul.mubr.bf16.gmra.mxu0 %v823
        %v937 = vpop.f32.mrf.mxu0
        %v938 = vadd.f32 %v845, %v937
        %v939 = vpop.f32.mrf.mxu0
        %v940 = vpop.f32.mrf.mxu0
        %v941 = vadd.f32 %v845, %v940
        %v942 = vpop.f32.mrf.mxu0
        %943 = vdwg.mxu0
        %v944 = vpack.c.bf16 %v933, %v930
        %v945 = vpack.c.bf16 %v941, %v938
        %v946 = vtanh.bf16.pop %v944
        %v947 = vtanh.bf16.pop %v945
        %v948 = vld [vmem:[#allocation12] sm:$0xf]
        %v949 = vld [vmem:[#allocation12 + $0x4] sm:$0xf]
        %v950 = vld [vmem:[#allocation12 + $0x8] sm:$0xf]
        %v951 = vld [vmem:[#allocation12 + $0xc] sm:$0xf]
        %v952 = vld [vmem:[#allocation12 + $0x10] sm:$0xf]
        %v953 = vld [vmem:[#allocation12 + $0x14] sm:$0xf]
        %v954 = vld [vmem:[#allocation12 + $0x18] sm:$0xf]
        %v955 = vld [vmem:[#allocation12 + $0x1c] sm:$0xf]
        %v956 = vld [vmem:[#allocation12 + $0x20] sm:$0xf]
        %v957 = vld [vmem:[#allocation12 + $0x24] sm:$0xf]
        %v958 = vld [vmem:[#allocation12 + $0x28] sm:$0xf]
        %v959 = vld [vmem:[#allocation12 + $0x2c] sm:$0xf]
        %v960 = vld [vmem:[#allocation12 + $0x30] sm:$0xf]
        %v961 = vld [vmem:[#allocation12 + $0x34] sm:$0xf]
        %v962 = vld [vmem:[#allocation12 + $0x38] sm:$0xf]
        %v963 = vld [vmem:[#allocation12 + $0x3c] sm:$0xf]
        %v964 = vld [vmem:[%s9] sm:$0x1]
        %v966 = vlaneseq
        %v967 = vshrl.u32 %v966, 7
        %v968 = vsub.s32 0, %v967
        %v969 = vrot.slane %v964, %v968
        %v987 = vunpack.c.l.b16 %v948
        %v988 = vunpack.c.l.b16 %v949
        %v989 = vunpack.c.l.b16 %v950
        %v990 = vunpack.c.l.b16 %v951
        %v991 = vunpack.c.l.b16 %v952
        %v992 = vunpack.c.l.b16 %v953
        %v993 = vunpack.c.l.b16 %v954
        %v994 = vunpack.c.l.b16 %v955
        %v995 = vunpack.c.l.b16 %v956
        %v996 = vunpack.c.l.b16 %v957
        %v997 = vunpack.c.l.b16 %v958
        %v998 = vunpack.c.l.b16 %v959
        %v999 = vunpack.c.l.b16 %v960
        %v1000 = vunpack.c.l.b16 %v961
        %v1001 = vunpack.c.l.b16 %v962
        %v1002 = vunpack.c.l.b16 %v963
        %v1003 = vpack.c.b16 %v988, %v987
        %v1004 = vpack.c.b16 %v990, %v989
        %v1005 = vpack.c.b16 %v992, %v991
        %v1006 = vpack.c.b16 %v994, %v993
        %v1007 = vpack.c.b16 %v996, %v995
        %v1008 = vpack.c.b16 %v998, %v997
        %v1009 = vpack.c.b16 %v1000, %v999
        %v1010 = vpack.c.b16 %v1002, %v1001
        %1019 = vmatprep.subr.bf16.mxu0 0
        %1020 = vmatpush1.bf16.msra.mxu0 %v1010
        %1021 = vmatprep.subr.bf16.mxu0 0
        %1022 = vmatpush1.bf16.msra.mxu0 %v1009
        %1023 = vmatprep.subr.bf16.mxu0 0
        %1024 = vmatpush1.bf16.msra.mxu0 %v1008
        %1025 = vmatprep.subr.bf16.mxu0 0
        %1026 = vmatpush1.bf16.msra.mxu0 %v1007
        %1027 = vmatprep.subr.bf16.mxu0 0
        %1028 = vmatpush1.bf16.msra.mxu0 %v1006
        %1029 = vmatprep.subr.bf16.mxu0 0
        %1030 = vmatpush1.bf16.msra.mxu0 %v1005
        %1031 = vmatprep.subr.bf16.mxu0 0
        %1032 = vmatpush1.bf16.msra.mxu0 %v1004
        %1033 = vmatprep.subr.bf16.mxu0 0
        %1034 = vmatpush1.bf16.msra.mxu0 %v1003
        %1035 = vmatprep.subr.bf16.mxu0 0
        %1036 = vmatpush2.bf16.msra.mxu0 0
        %1037 = vmatprep.subr.bf16.mxu0 0
        %1038 = vmatpush2.bf16.msra.mxu0 0
        %1039 = vmatprep.subr.bf16.mxu0 0
        %1040 = vmatpush2.bf16.msra.mxu0 0
        %1041 = vmatprep.subr.bf16.mxu0 0
        %1042 = vmatpush2.bf16.msra.mxu0 0
        %1043 = vmatprep.subr.bf16.mxu0 0
        %1044 = vmatpush2.bf16.msra.mxu0 0
        %1045 = vmatprep.subr.bf16.mxu0 0
        %1046 = vmatpush2.bf16.msra.mxu0 0
        %1047 = vmatprep.subr.bf16.mxu0 0
        %1048 = vmatpush2.bf16.msra.mxu0 0
        %1049 = vmatprep.subr.bf16.mxu0 0
        %1050 = vmatpush2.bf16.msra.mxu0 0
        %1051 = vmatprep.mubr.bf16.mxu0 0
        %1052 = vmatmul.mubr.bf16.gmra.mxu0 %v946
        %v1053 = vpop.f32.mrf.mxu0
        %v1054 = vadd.f32 %v969, %v1053
        %v1055 = vpop.f32.mrf.mxu0
        %v1056 = vpop.f32.mrf.mxu0
        %v1057 = vadd.f32 %v969, %v1056
        %v1058 = vpop.f32.mrf.mxu0
        %1059 = vmatprep.mubr.bf16.mxu0 0
        %1060 = vmatmul.mubr.bf16.gmra.mxu0 %v947
        %v1061 = vpop.f32.mrf.mxu0
        %v1062 = vadd.f32 %v969, %v1061
        %v1063 = vpop.f32.mrf.mxu0
        %v1064 = vpop.f32.mrf.mxu0
        %v1065 = vadd.f32 %v969, %v1064
        %v1066 = vpop.f32.mrf.mxu0
        %1067 = vdwg.mxu0
        %v1068 = vpack.c.bf16 %v1054, %v1054
        %v1069 = vpack.c.bf16 %v1057, %v1057
        %v1070 = vpack.c.bf16 %v1062, %v1062
        %v1071 = vpack.c.bf16 %v1065, %v1065
        %1072 = vst [vmem:[%s530] sm:$0xf] %v1068
        %1073 = vst [vmem:[%s530 + $0x4] sm:$0xf] %v1069
        %1074 = vst [vmem:[%s530 + $0x8] sm:$0xf] %v1070
        %1075 = vst [vmem:[%s530 + $0xc] sm:$0xf] %v1071
        %s1076 = sld [smem:[#allocation2]]
        %v1077 = vstv %s1076
        %v1078 = vrcp.pop %v1077
        %s1079 = vtos %v1078
        %v1080 = vstv %s1076
        %v1081 = vlog2.pop %v1080
        %v1082 = vmul.f32 %v1081, 0.6931472
        %s1083 = vtos %v1082
        %v1084 = vsub.f32 %v1054, %v539
        %v1085 = vsub.f32 %v1057, %v539
        %v1086 = vsub.f32 %v1062, %v539
        %v1087 = vsub.f32 %v1065, %v539
        %v1088 = vmul.f32 %v1084, %v1084
        %v1089 = vmul.f32 %v1085, %v1085
        %v1090 = vmul.f32 %v1086, %v1086
        %v1091 = vmul.f32 %v1087, %v1087
        %1092 = vadd.xlane.f32.xlu0 %v1088
        %v1093 = vpop.xlane.xlu0 %1092
        %1094 = vadd.xlane.f32.xlu0 %v1089
        %v1095 = vpop.xlane.xlu0 %1094
        %1096 = vadd.xlane.f32.xlu0 %v1090
        %v1097 = vpop.xlane.xlu0 %1096
        %1098 = vadd.xlane.f32.xlu0 %v1091
        %v1099 = vpop.xlane.xlu0 %1098
        %s1100 = smul.f32 %s1079, 0.5
        %s1101 = ssub.f32 0.0, %s1100
        %v1102 = vstv %s1101
        %v1103 = vmul.f32 %v1102, %v1093
        %v1104 = vmul.f32 %v1102, %v1095
        %v1105 = vmul.f32 %v1102, %v1097
        %v1106 = vmul.f32 %v1102, %v1099
        %s1107 = smul.f32 %s1083, 64.0
        %v1108 = vstv %s1107
        %v1109 = vsub.f32 %v1103, %v1108
        %v1110 = vsub.f32 %v1104, %v1108
        %v1111 = vsub.f32 %v1105, %v1108
        %v1112 = vsub.f32 %v1106, %v1108
        %v1113 = vmul.f32 %v797, %v797
        %v1114 = vmul.f32 %v805, %v805
        %v1115 = vadd.f32 %v1113, %v1114
        %v1116 = vsub.f32 %v1115, %v799
        %v1117 = vsub.f32 %v1116, 1.0
        %1118 = vadd.xlane.f32.xlu0 %v1117
        %v1119 = vpop.xlane.xlu0 %1118
        %v1120 = vmul.f32 %v1119, 0.5
        %v1121 = vsub.f32 %v1109, %v1120
        %v1122 = vsub.f32 %v1110, %v1120
        %v1123 = vsub.f32 %v1111, %v1120
        %v1124 = vsub.f32 %v1112, %v1120
        %v1125 = vmax.f32 %v1121, %v1122
        %v1126 = vmax.f32 %v1123, %v1124
        %v1127 = vmax.f32 %v1125, %v1126
        %v1128 = vsub.f32 %v1121, %v1127
        %v1129 = vsub.f32 %v1122, %v1127
        %v1130 = vsub.f32 %v1123, %v1127
        %v1131 = vsub.f32 %v1124, %v1127
        %v1132 = vmul.f32 %v1128, 1.442695
        %v1133 = vpow.pop %v1132
        %v1134 = vmul.f32 %v1129, 1.442695
        %v1135 = vpow.pop %v1134
        %v1136 = vmul.f32 %v1130, 1.442695
        %v1137 = vpow.pop %v1136
        %v1138 = vmul.f32 %v1131, 1.442695
        %v1139 = vpow.pop %v1138
        %v1140 = vadd.f32 %v1133, %v1135
        %v1141 = vadd.f32 %v1140, %v1137
        %v1142 = vadd.f32 %v1141, %v1139
        %v1143 = vlog2.pop %v1142
        %v1144 = vmul.f32 %v1143, 0.6931472
        %v1145 = vadd.f32 %v1127, %v1144
        %v1146 = vsub.f32 %v1145, 1.3862944
        %s1147 = smul.u32 %s39, 8
        %v1148 = vlaneseq
        %v1149 = vshrl.u32 %v1148, 7
        %v1150 = vstv %s1147
        %v1151 = vadd.s32 %v1150, %v1149
        %vm1152 = vcmp.lt.s32.totalorder %v1151, 2
        %v1153 = vsel %vm1152, 1, 0
        %v1154 = vcvt.s32.f32 %v1153
        %v1155 = vmul.f32 %v1146, %v1154
        %vm1156 = vcmask 7168
        %v1157 = vsel %vm1156, %v1155, 0.0
        %1158 = vadd.xlane.f32.xlu0 %v1157
        %v1159 = vpop.xlane.xlu0 %1158
        %v1160 = vrot.slane %v1159, 4
        %v1161 = vadd.f32 %v1159, %v1160
        %v1162 = vrot.slane %v1161, 2
        %v1163 = vadd.f32 %v1161, %v1162
        %v1164 = vrot.slane %v1163, 1
        %v1165 = vadd.f32 %v1163, %v1164
        %s1166 = vtos %v1165
        %v1167 = vmul.f32 %v1109, %v1154
        %v1168 = vmul.f32 %v1110, %v1154
        %v1169 = vmul.f32 %v1111, %v1154
        %v1170 = vmul.f32 %v1112, %v1154
        %v1171 = vsel %vm1156, %v1167, 0.0
        %v1172 = vsel %vm1156, %v1168, 0.0
        %v1173 = vadd.f32 %v1171, %v1172
        %v1174 = vsel %vm1156, %v1169, 0.0
        %v1175 = vadd.f32 %v1173, %v1174
        %v1176 = vsel %vm1156, %v1170, 0.0
        %v1177 = vadd.f32 %v1175, %v1176
        %1178 = vadd.xlane.f32.xlu0 %v1177
        %v1179 = vpop.xlane.xlu0 %1178
        %v1180 = vrot.slane %v1179, 4
        %v1181 = vadd.f32 %v1179, %v1180
        %v1182 = vrot.slane %v1181, 2
        %v1183 = vadd.f32 %v1181, %v1182
        %v1184 = vrot.slane %v1183, 1
        %v1185 = vadd.f32 %v1183, %v1184
        %s1186 = vtos %v1185
        %v1187 = vmul.f32 %v1120, %v1154
        %v1188 = vsel %vm1156, %v1187, 0.0
        %1189 = vadd.xlane.f32.xlu0 %v1188
        %v1190 = vpop.xlane.xlu0 %1189
        %v1191 = vrot.slane %v1190, 4
        %v1192 = vadd.f32 %v1190, %v1191
        %v1193 = vrot.slane %v1192, 2
        %v1194 = vadd.f32 %v1192, %v1193
        %v1195 = vrot.slane %v1194, 1
        %v1196 = vadd.f32 %v1194, %v1195
        %s1197 = vtos %v1196
        %vm1198 = vcmp.eq.s32.totalorder %v1149, 0
        %v1199 = vstv %s1166
        %v1200 = vsel %vm1198, %v1199, 0.0
        %vm1201 = vcmp.eq.s32.totalorder %v1149, 1
        %v1202 = vstv %s1186
        %v1203 = vsel %vm1201, %v1202, 0.0
        %v1204 = vadd.f32 %v1200, %v1203
        %vm1205 = vcmp.eq.s32.totalorder %v1149, 2
        %v1206 = vstv %s1197
        %v1207 = vsel %vm1205, %v1206, 0.0
        %v1208 = vadd.f32 %v1204, %v1207
        %1209 = vst [vmem:[%s537] sm:$0xff] %v1208
        %s1210 = sand.u32 %s288, 1
        %s1211 = scalar_lea.sflag [#allocation5], %s1210
        %s1212 = sand.u32 %s288, 1
        %s1213 = smul.addr %s1212, 16
        %s1214 = scalar_lea.vmem [#allocation14], %s1213
        %s1215 = sand.u32 %s314, 1
        %s1216 = scalar_lea.sflag [#allocation16], %s1215
        %s1217 = sand.u32 %s314, 1
        %s1218 = smul.addr %s1217, 8
        %s1219 = scalar_lea.vmem [#allocation15], %s1218
        // Predicated region
        $region89: #{tpu_custom_call.1} parent=63 // pred_check
          %p1220 = pneg %p298
        $region90: #{tpu_custom_call.1} parent=63 // pred_check_branch
          %1222 = sbr.rel (%p1220) target = $region92
        $region91: #{tpu_custom_call.1} parent=63 // pred_region
          %s1224 = ssub.s32 256, 256
          %1225 = vsyncadd %s1211, %s1224
          %s1226 = smul.addr %s39, 64
          %s1227 = scalar_lea.hbm %s11, %s1226
          %s1228 = sshll.u32 %s1214, 4
          %s1229 = int_to_ptr.vmem [resolvable:$true] %s1228
          %1234 = dma.vmem_to_hbm [thread:$0]  %s1229, 256, %s1227, %s1211, 64, 128, 4
        $region92: #{tpu_custom_call.1} parent=63 // pred_fallthru
          _
        // Predicated region
        $region93: #{tpu_custom_call.1} parent=63 // pred_check
          %p1235 = pneg %p324
        $region94: #{tpu_custom_call.1} parent=63 // pred_check_branch
          %1237 = sbr.rel (%p1235) target = $region96
        $region95: #{tpu_custom_call.1} parent=63 // pred_region
          %s1239 = ssub.s32 128, 128
          %1240 = vsyncadd %s1216, %s1239
          %s1241 = smul.addr %s39, 128
          %s1242 = scalar_lea.hbm %s12, %s1241
          %s1244 = sshll.u32 %s1219, 4
          %s1245 = int_to_ptr.vmem [resolvable:$true] %s1244
          %1247 = dma.vmem_to_hbm [thread:$0]  %s1245, 128, %s1242, %s1216
        $region96: #{tpu_custom_call.1} parent=63 // pred_fallthru
          _
      $region64: #{tpu_custom_call.1} parent=5 // pred_fallthru
        _
      %p1248 = scmp.le.s32.totalorder 2, %s34
      // Predicated region
      $region97: #{tpu_custom_call.1} parent=5 // pred_check
        %p1249 = pneg %p1248
      $region98: #{tpu_custom_call.1} parent=5 // pred_check_branch
        %1251 = sbr.rel (%p1249) target = $region100
      $region99: #{tpu_custom_call.1} parent=5 // pred_region
        %s1252 = ssub.s32 %s34, 2
        // Predicated region
        $region101: #{tpu_custom_call.1} parent=99 // pred_check
          %p1253 = pneg %p304
        $region102: #{tpu_custom_call.1} parent=99 // pred_check_branch
          %1255 = sbr.rel (%p1253) target = $region104
        $region103: #{tpu_custom_call.1} parent=99 // pred_region
          %s1256 = sand.u32 %s289, 1
          %s1257 = scalar_lea.sflag [#allocation5], %s1256
          %s1258 = sand.u32 %s289, 1
          %s1259 = smul.addr %s1258, 16
          %s1260 = scalar_lea.vmem [#allocation14], %s1259
          %1261 = dma.done %s1257, 256
        $region104: #{tpu_custom_call.1} parent=99 // pred_fallthru
          _
        // Predicated region
        $region105: #{tpu_custom_call.1} parent=99 // pred_check
          %p1262 = pneg %p330
        $region106: #{tpu_custom_call.1} parent=99 // pred_check_branch
          %1264 = sbr.rel (%p1262) target = $region108
        $region107: #{tpu_custom_call.1} parent=99 // pred_region
          %s1265 = sand.u32 %s315, 1
          %s1266 = scalar_lea.sflag [#allocation16], %s1265
          %s1267 = sand.u32 %s315, 1
          %s1268 = smul.addr %s1267, 8
          %s1269 = scalar_lea.vmem [#allocation15], %s1268
          %1270 = dma.done %s1266, 128
        $region108: #{tpu_custom_call.1} parent=99 // pred_fallthru
          _
      $region100: #{tpu_custom_call.1} parent=5 // pred_fallthru
        _
    $region6: #{tpu_custom_call.1} parent=1 // loop_footer
      %s38 = sadd.s32 1, %s34
    $region7: #{tpu_custom_call.1} parent=1 // loop_footer_branch
      %33 = sbr.rel target = $region3
    $region8: #{tpu_custom_call.1} parent=1 // loop_exit
      _
    %1271 = vsyncpa [#allocation4], 1
    %s1272 = scalar_lea.sflag [#allocation4], 1
    %1273 = vsyncpa %s1272, 1
    %1274 = vsyncpa [#allocation7], 1
    %1275 = vsyncpa [#allocation10], 1
    %s1276 = scalar_lea.sflag [#allocation10], 1
    %1277 = vsyncpa %s1276, 1
    %1278 = vsyncpa [#allocation13], 1
    %1279 = vsyncpa [#allocation5], 1
    %s1280 = scalar_lea.sflag [#allocation5], 1
    %1281 = vsyncpa %s1280, 1
    %1282 = vsyncpa [#allocation16], 1
    %s1283 = scalar_lea.sflag [#allocation16], 1
    %1284 = vsyncpa %s1283, 1

</llo_original>
